<compile_context>
chip_gen: v6e
topology: v6e:2x2x1
jax: 0.10.0
libtpu: 0.0.40
codegen_flags: <defaults>
</compile_context>

<pallas_src>
import functools

import jax
import jax.numpy as jnp
from jax import lax
from jax.experimental import pallas as pl
from jax.experimental.pallas import tpu as pltpu


_MAX_BLOCK_BATCH = 512   # [nodes=32, 512] f32 = 16 vregs per step: no spills
_SMALL_A = 8             # below this, MXU utilization is <5%; stay on the VPU


def _choose_block_batch(batch):
    padded = 128 * pl.cdiv(batch, 128)
    # Single tile when the whole (padded) batch fits; otherwise 512-lane tiles
    # (>=2 grid steps whenever B > 512, so v7x megacore gets both cores busy).
    return min(_MAX_BLOCK_BATCH, padded)


# ----------------------------------------------------------------------------
# Specialized kernel: num_assets == 1 (the module's default configuration).
# ----------------------------------------------------------------------------
def _hedge_payoff_kernel_a1(x_ref, w1_ref, b1_ref, w2_ref, b2_ref, out_ref,
                            *, strike, bs_price):
    """x_ref: [T+1, Bt]; w1/b1/w2: [T, N, 1]; b2: [T, 1, 1]; out: [1, Bt]."""
    T = w1_ref.shape[0]
    bt = x_ref.shape[1]

    hedge = jnp.zeros((1, bt), jnp.float32)
    price = x_ref[pl.ds(0, 1), :]                              # [1, Bt]
    # Static unroll over the small, static number of time steps: each step's
    # [N, Bt] hidden tile is produced and consumed immediately.
    for j in range(T):
        pricenew = x_ref[pl.ds(j + 1, 1), :]                   # [1, Bt]
        w1_j = w1_ref[j]                                       # [N, 1]
        b1_j = b1_ref[j]                                       # [N, 1]
        w2_j = w2_ref[j]                                       # [N, 1]
        b2_j = b2_ref[j]                                       # [1, 1]
        h = jnp.tanh(w1_j * price + b1_j)                      # [N, Bt] VPU+EUP
        strategy = (jnp.sum(w2_j * h, axis=0, keepdims=True)   # XLU sublane sum
                    + b2_j)                                    # [1, Bt]
        hedge = hedge + strategy * (pricenew - price)
        price = pricenew

    payoff = jnp.maximum(price - strike, 0.0) - hedge - bs_price
    out_ref[...] = payoff.astype(out_ref.dtype)


# ----------------------------------------------------------------------------
# General kernel: num_assets > 1 fallback (batch on lanes, assets on sublanes).
# ----------------------------------------------------------------------------
def _hedge_payoff_kernel(x_ref, w1t_ref, b1t_ref, w2_ref, b2t_ref, out_ref,
                         *, strike, bs_price):
    """x_ref: [T+1, A, Bt]; w1t/w2: [T, N, A]; b1t: [T, N, 1]; b2t: [T, A, 1];
    out_ref: [A, Bt]."""
    T = w1t_ref.shape[0]
    A = x_ref.shape[1]
    bt = x_ref.shape[2]
    N = w1t_ref.shape[1]

    if A > _SMALL_A:
        # Large asset count: per-step MXU contractions.
        hedge = jnp.zeros((A, bt), jnp.float32)
        price = x_ref[0]                                       # [A, Bt]
        for j in range(T):
            pricenew = x_ref[j + 1]                            # [A, Bt]
            w1_j, b1_j = w1t_ref[j], b1t_ref[j]                # [N, A], [N, 1]
            w2_j, b2_j = w2_ref[j], b2t_ref[j]                 # [N, A], [A, 1]
            h = jnp.tanh(jnp.dot(w1_j, price,
                                 preferred_element_type=jnp.float32) + b1_j)
            strategy = lax.dot_general(w2_j, h, (((0,), (0,)), ((), ())),
                                       preferred_element_type=jnp.float32) + b2_j
            hedge = hedge + strategy * (pricenew - price)
            price = pricenew
        payoff = jnp.maximum(price - strike, 0.0) - hedge - bs_price
        out_ref[...] = payoff.astype(out_ref.dtype)
    else:
        # Small asset count: VPU broadcast-multiply + sublane reductions,
        # handled per asset row (avoids a 3-D [N, A, Bt] intermediate).
        x0 = x_ref[0]                                          # [A, Bt]
        price = [x0[a:a + 1, :] for a in range(A)]             # A x [1, Bt]
        hedge = [jnp.zeros((1, bt), jnp.float32) for _ in range(A)]
        for j in range(T):
            xj = x_ref[j + 1]                                  # [A, Bt]
            pricenew = [xj[a:a + 1, :] for a in range(A)]
            w1_j, b1_j = w1t_ref[j], b1t_ref[j]                # [N, A], [N, 1]
            w2_j, b2_j = w2_ref[j], b2t_ref[j]                 # [N, A], [A, 1]
            z = jnp.broadcast_to(b1_j, (N, bt))
            for a in range(A):
                z = z + w1_j[:, a:a + 1] * price[a]            # [N, Bt]
            h = jnp.tanh(z)
            for a in range(A):
                strat_a = (jnp.sum(w2_j[:, a:a + 1] * h, axis=0, keepdims=True)
                           + b2_j[a:a + 1, :])                 # [1, Bt]
                hedge[a] = hedge[a] + strat_a * (pricenew[a] - price[a])
            price = pricenew
        for a in range(A):
            payoff_a = (jnp.maximum(price[a] - strike, 0.0)
                        - hedge[a] - bs_price)
            out_ref[pl.ds(a, 1), :] = payoff_a.astype(out_ref.dtype)


# ----------------------------------------------------------------------------
# Wrapper
# ----------------------------------------------------------------------------
def model_forward(x, w1, b1, w2, b2, *, strike, bs_price, block_batch=None):
    """x: [B, T+1, A]; w1: [T, A, N]; b1: [T, 1, N]; w2: [T, N, A]; b2: [T, 1, A].

    Returns PayOff(HedgeNetwork(x)), shape [B, A].
    """
    B, Tp1, A = x.shape
    T = Tp1 - 1
    N = w1.shape[2]

    if block_batch is None:
        block_batch = _choose_block_batch(B)
    grid_b = pl.cdiv(B, block_batch)
    Bp = grid_b * block_batch

    compiler_params = pltpu.CompilerParams(dimension_semantics=("parallel",))

    # NOTE: for very large B the lane-major transpose of x is an extra HBM pass;
    # producing the price paths lane-major upstream would remove it.  Weight
    # transposes below are tiny and could be folded into parameter init.
    if A == 1:
        xT = jnp.transpose(x[:, :, 0], (1, 0))                 # [T+1, B]
        if Bp != B:
            xT = jnp.pad(xT, ((0, 0), (0, Bp - B)))
        w1s = jnp.transpose(w1, (0, 2, 1))                     # [T, N, 1]
        b1s = jnp.transpose(b1, (0, 2, 1))                     # [T, N, 1]
        w2s = w2                                               # [T, N, 1]
        b2s = jnp.transpose(b2, (0, 2, 1))                     # [T, 1, 1]

        kernel = functools.partial(_hedge_payoff_kernel_a1,
                                   strike=float(strike),
                                   bs_price=float(bs_price))
        out_t = pl.pallas_call(
            kernel,
            out_shape=jax.ShapeDtypeStruct((1, Bp), x.dtype),
            grid=(grid_b,),
            in_specs=[
                pl.BlockSpec((Tp1, block_batch), lambda i: (0, i)),   # x tile
                pl.BlockSpec((T, N, 1), lambda i: (0, 0, 0)),         # w1 resident
                pl.BlockSpec((T, N, 1), lambda i: (0, 0, 0)),         # b1
                pl.BlockSpec((T, N, 1), lambda i: (0, 0, 0)),         # w2
                pl.BlockSpec((T, 1, 1), lambda i: (0, 0, 0)),         # b2
            ],
            out_specs=pl.BlockSpec((1, block_batch), lambda i: (0, i)),
            compiler_params=compiler_params,
        )(xT, w1s, b1s, w2s, b2s)
        return jnp.transpose(out_t, (1, 0))[:B]                 # [B, 1]

    # General num_assets fallback.
    xT = jnp.transpose(x, (1, 2, 0))                            # [T+1, A, B]
    if Bp != B:
        xT = jnp.pad(xT, ((0, 0), (0, 0), (0, Bp - B)))
    w1t = jnp.transpose(w1, (0, 2, 1))                          # [T, N, A]
    b1t = jnp.transpose(b1, (0, 2, 1))                          # [T, N, 1]
    b2t = jnp.transpose(b2, (0, 2, 1))                          # [T, A, 1]

    kernel = functools.partial(_hedge_payoff_kernel,
                               strike=float(strike), bs_price=float(bs_price))
    out_t = pl.pallas_call(
        kernel,
        out_shape=jax.ShapeDtypeStruct((A, Bp), x.dtype),
        grid=(grid_b,),
        in_specs=[
            pl.BlockSpec((Tp1, A, block_batch), lambda i: (0, 0, i)),
            pl.BlockSpec((T, N, A), lambda i: (0, 0, 0)),
            pl.BlockSpec((T, N, 1), lambda i: (0, 0, 0)),
            pl.BlockSpec((T, N, A), lambda i: (0, 0, 0)),
            pl.BlockSpec((T, A, 1), lambda i: (0, 0, 0)),
        ],
        out_specs=pl.BlockSpec((A, block_batch), lambda i: (0, i)),
        compiler_params=compiler_params,
    )(xT, w1t, b1t, w2, b2t)
    return jnp.transpose(out_t, (1, 0))[:B]                     # [B, A]


def model_forward_ref(x, w1, b1, w2, b2, *, strike, bs_price):
    """Pure-JAX reference (mirrors the PyTorch forward exactly)."""
    T = w1.shape[0]
    price = x[:, 0, :]
    hedge = jnp.zeros_like(price)
    for j in range(T):
        h = jnp.tanh(price @ w1[j] + b1[j])
        strategy = h @ w2[j] + b2[j]
        pricenew = x[:, j + 1, :]
        hedge = hedge + strategy * (pricenew - price)
        price = pricenew
    return jnp.maximum(price - strike, 0.0) - hedge - bs_price


def init_params(key, time_steps, num_assets, nodes):
    """Deterministic init mimicking torch.nn.Linear (uniform +-1/sqrt(fan_in))."""
    keys = jax.random.split(key, 4)
    bound1 = 1.0 / jnp.sqrt(num_assets)
    bound2 = 1.0 / jnp.sqrt(nodes)
    w1 = jax.random.uniform(keys[0], (time_steps, num_assets, nodes),
                            jnp.float32, -bound1, bound1)
    b1 = jax.random.uniform(keys[1], (time_steps, 1, nodes),
                            jnp.float32, -bound1, bound1)
    w2 = jax.random.uniform(keys[2], (time_steps, nodes, num_assets),
                            jnp.float32, -bound2, bound2)
    b2 = jax.random.uniform(keys[3], (time_steps, 1, num_assets),
                            jnp.float32, -bound2, bound2)
    return w1, b1, w2, b2


if __name__ == "__main__":
    strike = 1.0
    bs_price = 0.05
    batch = 200          # not a multiple of 128 -> exercises padding
    time_steps = 10
    nodes = 32

    key = jax.random.PRNGKey(0)
    k_x, k_p, k_x2, k_p2 = jax.random.split(key, 4)

    fwd = jax.jit(functools.partial(model_forward, strike=strike,
                                    bs_price=bs_price))

    # --- default module configuration: num_assets = 1 (fast squeezed path) ---
    num_assets = 1
    x = 1.0 + 0.1 * jax.random.normal(
        k_x, (batch, time_steps + 1, num_assets), dtype=jnp.float32)
    w1, b1, w2, b2 = init_params(k_p, time_steps, num_assets, nodes)

    out = jax.block_until_ready(fwd(x, w1, b1, w2, b2))
    ref = model_forward_ref(x, w1, b1, w2, b2, strike=strike, bs_price=bs_price)
    assert out.shape == (batch, num_assets)
    assert jnp.allclose(out, ref, atol=1e-5, rtol=1e-4)

    # --- exercise the general num_assets > 1 (small-A VPU) fallback path -----
    num_assets2 = 3
    x2 = 1.0 + 0.1 * jax.random.normal(
        k_x2, (batch, time_steps + 1, num_assets2), dtype=jnp.float32)
    w1b, b1b, w2b, b2b = init_params(k_p2, time_steps, num_assets2, nodes)
    out2 = jax.block_until_ready(fwd(x2, w1b, b1b, w2b, b2b))
    ref2 = model_forward_ref(x2, w1b, b1b, w2b, b2b,
                             strike=strike, bs_price=bs_price)
    assert out2.shape == (batch, num_assets2)
    assert jnp.allclose(out2, ref2, atol=1e-5, rtol=1e-4)

    print("KERNEL_OK")
</pallas_src>

<mosaic_0001>
module attributes {stable_mosaic.version = 11 : i64} {
  func.func @_hedge_payoff_kernel_a1(%arg0: i32, %arg1: memref<11x256xf32, #tpu.memory_space<vmem>>, %arg2: memref<10x32x1xf32, #tpu.memory_space<vmem>>, %arg3: memref<10x32x1xf32, #tpu.memory_space<vmem>>, %arg4: memref<10x32x1xf32, #tpu.memory_space<vmem>>, %arg5: memref<10x1x1xf32, #tpu.memory_space<vmem>>, %arg6: memref<1x256xf32, #tpu.memory_space<vmem>>) attributes {dimension_semantics = [#tpu.dimension_semantics<parallel>], iteration_bounds = array<i64: 1>, scalar_prefetch = 0 : i64, scratch_operands = 0 : i64, tpu.core_type = #tpu.core_type<tc>, window_params = [{transform_indices = @transform_0, window_bounds = array<i64: 11, 256>}, {pipeline_mode = #tpu.pipeline_mode<synchronous>, transform_indices = @transform_1, window_bounds = array<i64: 10, 32, 1>}, {pipeline_mode = #tpu.pipeline_mode<synchronous>, transform_indices = @transform_2, window_bounds = array<i64: 10, 32, 1>}, {pipeline_mode = #tpu.pipeline_mode<synchronous>, transform_indices = @transform_3, window_bounds = array<i64: 10, 32, 1>}, {pipeline_mode = #tpu.pipeline_mode<synchronous>, transform_indices = @transform_4, window_bounds = array<i64: 10, 1, 1>}, {transform_indices = @transform_5, window_bounds = array<i64: 1, 256>}]} {
    %cst = arith.constant 0.000000e+00 : f32
    %0 = vector.broadcast %cst : f32 to vector<1x256xf32>
    %c0 = arith.constant 0 : index
    %c0_0 = arith.constant 0 : index
    %1 = vector.load %arg1[%c0, %c0_0] : memref<11x256xf32, #tpu.memory_space<vmem>>, vector<1x256xf32>
    %c1 = arith.constant 1 : index
    %c0_1 = arith.constant 0 : index
    %2 = vector.load %arg1[%c1, %c0_1] : memref<11x256xf32, #tpu.memory_space<vmem>>, vector<1x256xf32>
    %c0_2 = arith.constant 0 : index
    %c0_3 = arith.constant 0 : index
    %c0_4 = arith.constant 0 : index
    %3 = vector.load %arg2[%c0_2, %c0_3, %c0_4] : memref<10x32x1xf32, #tpu.memory_space<vmem>>, vector<1x32x1xf32>
    %4 = vector.shape_cast %3 : vector<1x32x1xf32> to vector<32x1xf32>
    %c0_5 = arith.constant 0 : index
    %c0_6 = arith.constant 0 : index
    %c0_7 = arith.constant 0 : index
    %5 = vector.load %arg3[%c0_5, %c0_6, %c0_7] : memref<10x32x1xf32, #tpu.memory_space<vmem>>, vector<1x32x1xf32>
    %6 = vector.shape_cast %5 : vector<1x32x1xf32> to vector<32x1xf32>
    %c0_8 = arith.constant 0 : index
    %c0_9 = arith.constant 0 : index
    %c0_10 = arith.constant 0 : index
    %7 = vector.load %arg4[%c0_8, %c0_9, %c0_10] : memref<10x32x1xf32, #tpu.memory_space<vmem>>, vector<1x32x1xf32>
    %8 = vector.shape_cast %7 : vector<1x32x1xf32> to vector<32x1xf32>
    %c0_11 = arith.constant 0 : index
    %c0_12 = arith.constant 0 : index
    %c0_13 = arith.constant 0 : index
    %9 = vector.load %arg5[%c0_11, %c0_12, %c0_13] : memref<10x1x1xf32, #tpu.memory_space<vmem>>, vector<1x1x1xf32>
    %10 = vector.shape_cast %9 : vector<1x1x1xf32> to vector<1x1xf32>
    %11 = vector.broadcast %4 : vector<32x1xf32> to vector<32x256xf32>
    %12 = vector.broadcast %1 : vector<1x256xf32> to vector<32x256xf32>
    %13 = arith.mulf %11, %12 : vector<32x256xf32>
    %14 = vector.broadcast %6 : vector<32x1xf32> to vector<32x256xf32>
    %15 = arith.addf %13, %14 : vector<32x256xf32>
    %16 = math.tanh %15 : vector<32x256xf32>
    %17 = vector.broadcast %8 : vector<32x1xf32> to vector<32x256xf32>
    %18 = arith.mulf %17, %16 : vector<32x256xf32>
    %cst_14 = arith.constant dense<0.000000e+00> : vector<256xf32>
    %19 = vector.multi_reduction <add>, %18, %cst_14 [0] : vector<32x256xf32> to vector<256xf32>
    %20 = vector.shape_cast %19 : vector<256xf32> to vector<1x256xf32>
    %21 = vector.broadcast %10 : vector<1x1xf32> to vector<1x256xf32>
    %22 = arith.addf %20, %21 : vector<1x256xf32>
    %23 = arith.subf %2, %1 : vector<1x256xf32>
    %24 = arith.mulf %22, %23 : vector<1x256xf32>
    %25 = arith.addf %0, %24 : vector<1x256xf32>
    %c2 = arith.constant 2 : index
    %c0_15 = arith.constant 0 : index
    %26 = vector.load %arg1[%c2, %c0_15] : memref<11x256xf32, #tpu.memory_space<vmem>>, vector<1x256xf32>
    %c1_16 = arith.constant 1 : index
    %c0_17 = arith.constant 0 : index
    %c0_18 = arith.constant 0 : index
    %27 = vector.load %arg2[%c1_16, %c0_17, %c0_18] : memref<10x32x1xf32, #tpu.memory_space<vmem>>, vector<1x32x1xf32>
    %28 = vector.shape_cast %27 : vector<1x32x1xf32> to vector<32x1xf32>
    %c1_19 = arith.constant 1 : index
    %c0_20 = arith.constant 0 : index
    %c0_21 = arith.constant 0 : index
    %29 = vector.load %arg3[%c1_19, %c0_20, %c0_21] : memref<10x32x1xf32, #tpu.memory_space<vmem>>, vector<1x32x1xf32>
    %30 = vector.shape_cast %29 : vector<1x32x1xf32> to vector<32x1xf32>
    %c1_22 = arith.constant 1 : index
    %c0_23 = arith.constant 0 : index
    %c0_24 = arith.constant 0 : index
    %31 = vector.load %arg4[%c1_22, %c0_23, %c0_24] : memref<10x32x1xf32, #tpu.memory_space<vmem>>, vector<1x32x1xf32>
    %32 = vector.shape_cast %31 : vector<1x32x1xf32> to vector<32x1xf32>
    %c1_25 = arith.constant 1 : index
    %c0_26 = arith.constant 0 : index
    %c0_27 = arith.constant 0 : index
    %33 = vector.load %arg5[%c1_25, %c0_26, %c0_27] : memref<10x1x1xf32, #tpu.memory_space<vmem>>, vector<1x1x1xf32>
    %34 = vector.shape_cast %33 : vector<1x1x1xf32> to vector<1x1xf32>
    %35 = vector.broadcast %28 : vector<32x1xf32> to vector<32x256xf32>
    %36 = vector.broadcast %2 : vector<1x256xf32> to vector<32x256xf32>
    %37 = arith.mulf %35, %36 : vector<32x256xf32>
    %38 = vector.broadcast %30 : vector<32x1xf32> to vector<32x256xf32>
    %39 = arith.addf %37, %38 : vector<32x256xf32>
    %40 = math.tanh %39 : vector<32x256xf32>
    %41 = vector.broadcast %32 : vector<32x1xf32> to vector<32x256xf32>
    %42 = arith.mulf %41, %40 : vector<32x256xf32>
    %cst_28 = arith.constant dense<0.000000e+00> : vector<256xf32>
    %43 = vector.multi_reduction <add>, %42, %cst_28 [0] : vector<32x256xf32> to vector<256xf32>
    %44 = vector.shape_cast %43 : vector<256xf32> to vector<1x256xf32>
    %45 = vector.broadcast %34 : vector<1x1xf32> to vector<1x256xf32>
    %46 = arith.addf %44, %45 : vector<1x256xf32>
    %47 = arith.subf %26, %2 : vector<1x256xf32>
    %48 = arith.mulf %46, %47 : vector<1x256xf32>
    %49 = arith.addf %25, %48 : vector<1x256xf32>
    %c3 = arith.constant 3 : index
    %c0_29 = arith.constant 0 : index
    %50 = vector.load %arg1[%c3, %c0_29] : memref<11x256xf32, #tpu.memory_space<vmem>>, vector<1x256xf32>
    %c2_30 = arith.constant 2 : index
    %c0_31 = arith.constant 0 : index
    %c0_32 = arith.constant 0 : index
    %51 = vector.load %arg2[%c2_30, %c0_31, %c0_32] : memref<10x32x1xf32, #tpu.memory_space<vmem>>, vector<1x32x1xf32>
    %52 = vector.shape_cast %51 : vector<1x32x1xf32> to vector<32x1xf32>
    %c2_33 = arith.constant 2 : index
    %c0_34 = arith.constant 0 : index
    %c0_35 = arith.constant 0 : index
    %53 = vector.load %arg3[%c2_33, %c0_34, %c0_35] : memref<10x32x1xf32, #tpu.memory_space<vmem>>, vector<1x32x1xf32>
    %54 = vector.shape_cast %53 : vector<1x32x1xf32> to vector<32x1xf32>
    %c2_36 = arith.constant 2 : index
    %c0_37 = arith.constant 0 : index
    %c0_38 = arith.constant 0 : index
    %55 = vector.load %arg4[%c2_36, %c0_37, %c0_38] : memref<10x32x1xf32, #tpu.memory_space<vmem>>, vector<1x32x1xf32>
    %56 = vector.shape_cast %55 : vector<1x32x1xf32> to vector<32x1xf32>
    %c2_39 = arith.constant 2 : index
    %c0_40 = arith.constant 0 : index
    %c0_41 = arith.constant 0 : index
    %57 = vector.load %arg5[%c2_39, %c0_40, %c0_41] : memref<10x1x1xf32, #tpu.memory_space<vmem>>, vector<1x1x1xf32>
    %58 = vector.shape_cast %57 : vector<1x1x1xf32> to vector<1x1xf32>
    %59 = vector.broadcast %52 : vector<32x1xf32> to vector<32x256xf32>
    %60 = vector.broadcast %26 : vector<1x256xf32> to vector<32x256xf32>
    %61 = arith.mulf %59, %60 : vector<32x256xf32>
    %62 = vector.broadcast %54 : vector<32x1xf32> to vector<32x256xf32>
    %63 = arith.addf %61, %62 : vector<32x256xf32>
    %64 = math.tanh %63 : vector<32x256xf32>
    %65 = vector.broadcast %56 : vector<32x1xf32> to vector<32x256xf32>
    %66 = arith.mulf %65, %64 : vector<32x256xf32>
    %cst_42 = arith.constant dense<0.000000e+00> : vector<256xf32>
    %67 = vector.multi_reduction <add>, %66, %cst_42 [0] : vector<32x256xf32> to vector<256xf32>
    %68 = vector.shape_cast %67 : vector<256xf32> to vector<1x256xf32>
    %69 = vector.broadcast %58 : vector<1x1xf32> to vector<1x256xf32>
    %70 = arith.addf %68, %69 : vector<1x256xf32>
    %71 = arith.subf %50, %26 : vector<1x256xf32>
    %72 = arith.mulf %70, %71 : vector<1x256xf32>
    %73 = arith.addf %49, %72 : vector<1x256xf32>
    %c4 = arith.constant 4 : index
    %c0_43 = arith.constant 0 : index
    %74 = vector.load %arg1[%c4, %c0_43] : memref<11x256xf32, #tpu.memory_space<vmem>>, vector<1x256xf32>
    %c3_44 = arith.constant 3 : index
    %c0_45 = arith.constant 0 : index
    %c0_46 = arith.constant 0 : index
    %75 = vector.load %arg2[%c3_44, %c0_45, %c0_46] : memref<10x32x1xf32, #tpu.memory_space<vmem>>, vector<1x32x1xf32>
    %76 = vector.shape_cast %75 : vector<1x32x1xf32> to vector<32x1xf32>
    %c3_47 = arith.constant 3 : index
    %c0_48 = arith.constant 0 : index
    %c0_49 = arith.constant 0 : index
    %77 = vector.load %arg3[%c3_47, %c0_48, %c0_49] : memref<10x32x1xf32, #tpu.memory_space<vmem>>, vector<1x32x1xf32>
    %78 = vector.shape_cast %77 : vector<1x32x1xf32> to vector<32x1xf32>
    %c3_50 = arith.constant 3 : index
    %c0_51 = arith.constant 0 : index
    %c0_52 = arith.constant 0 : index
    %79 = vector.load %arg4[%c3_50, %c0_51, %c0_52] : memref<10x32x1xf32, #tpu.memory_space<vmem>>, vector<1x32x1xf32>
    %80 = vector.shape_cast %79 : vector<1x32x1xf32> to vector<32x1xf32>
    %c3_53 = arith.constant 3 : index
    %c0_54 = arith.constant 0 : index
    %c0_55 = arith.constant 0 : index
    %81 = vector.load %arg5[%c3_53, %c0_54, %c0_55] : memref<10x1x1xf32, #tpu.memory_space<vmem>>, vector<1x1x1xf32>
    %82 = vector.shape_cast %81 : vector<1x1x1xf32> to vector<1x1xf32>
    %83 = vector.broadcast %76 : vector<32x1xf32> to vector<32x256xf32>
    %84 = vector.broadcast %50 : vector<1x256xf32> to vector<32x256xf32>
    %85 = arith.mulf %83, %84 : vector<32x256xf32>
    %86 = vector.broadcast %78 : vector<32x1xf32> to vector<32x256xf32>
    %87 = arith.addf %85, %86 : vector<32x256xf32>
    %88 = math.tanh %87 : vector<32x256xf32>
    %89 = vector.broadcast %80 : vector<32x1xf32> to vector<32x256xf32>
    %90 = arith.mulf %89, %88 : vector<32x256xf32>
    %cst_56 = arith.constant dense<0.000000e+00> : vector<256xf32>
    %91 = vector.multi_reduction <add>, %90, %cst_56 [0] : vector<32x256xf32> to vector<256xf32>
    %92 = vector.shape_cast %91 : vector<256xf32> to vector<1x256xf32>
    %93 = vector.broadcast %82 : vector<1x1xf32> to vector<1x256xf32>
    %94 = arith.addf %92, %93 : vector<1x256xf32>
    %95 = arith.subf %74, %50 : vector<1x256xf32>
    %96 = arith.mulf %94, %95 : vector<1x256xf32>
    %97 = arith.addf %73, %96 : vector<1x256xf32>
    %c5 = arith.constant 5 : index
    %c0_57 = arith.constant 0 : index
    %98 = vector.load %arg1[%c5, %c0_57] : memref<11x256xf32, #tpu.memory_space<vmem>>, vector<1x256xf32>
    %c4_58 = arith.constant 4 : index
    %c0_59 = arith.constant 0 : index
    %c0_60 = arith.constant 0 : index
    %99 = vector.load %arg2[%c4_58, %c0_59, %c0_60] : memref<10x32x1xf32, #tpu.memory_space<vmem>>, vector<1x32x1xf32>
    %100 = vector.shape_cast %99 : vector<1x32x1xf32> to vector<32x1xf32>
    %c4_61 = arith.constant 4 : index
    %c0_62 = arith.constant 0 : index
    %c0_63 = arith.constant 0 : index
    %101 = vector.load %arg3[%c4_61, %c0_62, %c0_63] : memref<10x32x1xf32, #tpu.memory_space<vmem>>, vector<1x32x1xf32>
    %102 = vector.shape_cast %101 : vector<1x32x1xf32> to vector<32x1xf32>
    %c4_64 = arith.constant 4 : index
    %c0_65 = arith.constant 0 : index
    %c0_66 = arith.constant 0 : index
    %103 = vector.load %arg4[%c4_64, %c0_65, %c0_66] : memref<10x32x1xf32, #tpu.memory_space<vmem>>, vector<1x32x1xf32>
    %104 = vector.shape_cast %103 : vector<1x32x1xf32> to vector<32x1xf32>
    %c4_67 = arith.constant 4 : index
    %c0_68 = arith.constant 0 : index
    %c0_69 = arith.constant 0 : index
    %105 = vector.load %arg5[%c4_67, %c0_68, %c0_69] : memref<10x1x1xf32, #tpu.memory_space<vmem>>, vector<1x1x1xf32>
    %106 = vector.shape_cast %105 : vector<1x1x1xf32> to vector<1x1xf32>
    %107 = vector.broadcast %100 : vector<32x1xf32> to vector<32x256xf32>
    %108 = vector.broadcast %74 : vector<1x256xf32> to vector<32x256xf32>
    %109 = arith.mulf %107, %108 : vector<32x256xf32>
    %110 = vector.broadcast %102 : vector<32x1xf32> to vector<32x256xf32>
    %111 = arith.addf %109, %110 : vector<32x256xf32>
    %112 = math.tanh %111 : vector<32x256xf32>
    %113 = vector.broadcast %104 : vector<32x1xf32> to vector<32x256xf32>
    %114 = arith.mulf %113, %112 : vector<32x256xf32>
    %cst_70 = arith.constant dense<0.000000e+00> : vector<256xf32>
    %115 = vector.multi_reduction <add>, %114, %cst_70 [0] : vector<32x256xf32> to vector<256xf32>
    %116 = vector.shape_cast %115 : vector<256xf32> to vector<1x256xf32>
    %117 = vector.broadcast %106 : vector<1x1xf32> to vector<1x256xf32>
    %118 = arith.addf %116, %117 : vector<1x256xf32>
    %119 = arith.subf %98, %74 : vector<1x256xf32>
    %120 = arith.mulf %118, %119 : vector<1x256xf32>
    %121 = arith.addf %97, %120 : vector<1x256xf32>
    %c6 = arith.constant 6 : index
    %c0_71 = arith.constant 0 : index
    %122 = vector.load %arg1[%c6, %c0_71] : memref<11x256xf32, #tpu.memory_space<vmem>>, vector<1x256xf32>
    %c5_72 = arith.constant 5 : index
    %c0_73 = arith.constant 0 : index
    %c0_74 = arith.constant 0 : index
    %123 = vector.load %arg2[%c5_72, %c0_73, %c0_74] : memref<10x32x1xf32, #tpu.memory_space<vmem>>, vector<1x32x1xf32>
    %124 = vector.shape_cast %123 : vector<1x32x1xf32> to vector<32x1xf32>
    %c5_75 = arith.constant 5 : index
    %c0_76 = arith.constant 0 : index
    %c0_77 = arith.constant 0 : index
    %125 = vector.load %arg3[%c5_75, %c0_76, %c0_77] : memref<10x32x1xf32, #tpu.memory_space<vmem>>, vector<1x32x1xf32>
    %126 = vector.shape_cast %125 : vector<1x32x1xf32> to vector<32x1xf32>
    %c5_78 = arith.constant 5 : index
    %c0_79 = arith.constant 0 : index
    %c0_80 = arith.constant 0 : index
    %127 = vector.load %arg4[%c5_78, %c0_79, %c0_80] : memref<10x32x1xf32, #tpu.memory_space<vmem>>, vector<1x32x1xf32>
    %128 = vector.shape_cast %127 : vector<1x32x1xf32> to vector<32x1xf32>
    %c5_81 = arith.constant 5 : index
    %c0_82 = arith.constant 0 : index
    %c0_83 = arith.constant 0 : index
    %129 = vector.load %arg5[%c5_81, %c0_82, %c0_83] : memref<10x1x1xf32, #tpu.memory_space<vmem>>, vector<1x1x1xf32>
    %130 = vector.shape_cast %129 : vector<1x1x1xf32> to vector<1x1xf32>
    %131 = vector.broadcast %124 : vector<32x1xf32> to vector<32x256xf32>
    %132 = vector.broadcast %98 : vector<1x256xf32> to vector<32x256xf32>
    %133 = arith.mulf %131, %132 : vector<32x256xf32>
    %134 = vector.broadcast %126 : vector<32x1xf32> to vector<32x256xf32>
    %135 = arith.addf %133, %134 : vector<32x256xf32>
    %136 = math.tanh %135 : vector<32x256xf32>
    %137 = vector.broadcast %128 : vector<32x1xf32> to vector<32x256xf32>
    %138 = arith.mulf %137, %136 : vector<32x256xf32>
    %cst_84 = arith.constant dense<0.000000e+00> : vector<256xf32>
    %139 = vector.multi_reduction <add>, %138, %cst_84 [0] : vector<32x256xf32> to vector<256xf32>
    %140 = vector.shape_cast %139 : vector<256xf32> to vector<1x256xf32>
    %141 = vector.broadcast %130 : vector<1x1xf32> to vector<1x256xf32>
    %142 = arith.addf %140, %141 : vector<1x256xf32>
    %143 = arith.subf %122, %98 : vector<1x256xf32>
    %144 = arith.mulf %142, %143 : vector<1x256xf32>
    %145 = arith.addf %121, %144 : vector<1x256xf32>
    %c7 = arith.constant 7 : index
    %c0_85 = arith.constant 0 : index
    %146 = vector.load %arg1[%c7, %c0_85] : memref<11x256xf32, #tpu.memory_space<vmem>>, vector<1x256xf32>
    %c6_86 = arith.constant 6 : index
    %c0_87 = arith.constant 0 : index
    %c0_88 = arith.constant 0 : index
    %147 = vector.load %arg2[%c6_86, %c0_87, %c0_88] : memref<10x32x1xf32, #tpu.memory_space<vmem>>, vector<1x32x1xf32>
    %148 = vector.shape_cast %147 : vector<1x32x1xf32> to vector<32x1xf32>
    %c6_89 = arith.constant 6 : index
    %c0_90 = arith.constant 0 : index
    %c0_91 = arith.constant 0 : index
    %149 = vector.load %arg3[%c6_89, %c0_90, %c0_91] : memref<10x32x1xf32, #tpu.memory_space<vmem>>, vector<1x32x1xf32>
    %150 = vector.shape_cast %149 : vector<1x32x1xf32> to vector<32x1xf32>
    %c6_92 = arith.constant 6 : index
    %c0_93 = arith.constant 0 : index
    %c0_94 = arith.constant 0 : index
    %151 = vector.load %arg4[%c6_92, %c0_93, %c0_94] : memref<10x32x1xf32, #tpu.memory_space<vmem>>, vector<1x32x1xf32>
    %152 = vector.shape_cast %151 : vector<1x32x1xf32> to vector<32x1xf32>
    %c6_95 = arith.constant 6 : index
    %c0_96 = arith.constant 0 : index
    %c0_97 = arith.constant 0 : index
    %153 = vector.load %arg5[%c6_95, %c0_96, %c0_97] : memref<10x1x1xf32, #tpu.memory_space<vmem>>, vector<1x1x1xf32>
    %154 = vector.shape_cast %153 : vector<1x1x1xf32> to vector<1x1xf32>
    %155 = vector.broadcast %148 : vector<32x1xf32> to vector<32x256xf32>
    %156 = vector.broadcast %122 : vector<1x256xf32> to vector<32x256xf32>
    %157 = arith.mulf %155, %156 : vector<32x256xf32>
    %158 = vector.broadcast %150 : vector<32x1xf32> to vector<32x256xf32>
    %159 = arith.addf %157, %158 : vector<32x256xf32>
    %160 = math.tanh %159 : vector<32x256xf32>
    %161 = vector.broadcast %152 : vector<32x1xf32> to vector<32x256xf32>
    %162 = arith.mulf %161, %160 : vector<32x256xf32>
    %cst_98 = arith.constant dense<0.000000e+00> : vector<256xf32>
    %163 = vector.multi_reduction <add>, %162, %cst_98 [0] : vector<32x256xf32> to vector<256xf32>
    %164 = vector.shape_cast %163 : vector<256xf32> to vector<1x256xf32>
    %165 = vector.broadcast %154 : vector<1x1xf32> to vector<1x256xf32>
    %166 = arith.addf %164, %165 : vector<1x256xf32>
    %167 = arith.subf %146, %122 : vector<1x256xf32>
    %168 = arith.mulf %166, %167 : vector<1x256xf32>
    %169 = arith.addf %145, %168 : vector<1x256xf32>
    %c8 = arith.constant 8 : index
    %c0_99 = arith.constant 0 : index
    %170 = vector.load %arg1[%c8, %c0_99] : memref<11x256xf32, #tpu.memory_space<vmem>>, vector<1x256xf32>
    %c7_100 = arith.constant 7 : index
    %c0_101 = arith.constant 0 : index
    %c0_102 = arith.constant 0 : index
    %171 = vector.load %arg2[%c7_100, %c0_101, %c0_102] : memref<10x32x1xf32, #tpu.memory_space<vmem>>, vector<1x32x1xf32>
    %172 = vector.shape_cast %171 : vector<1x32x1xf32> to vector<32x1xf32>
    %c7_103 = arith.constant 7 : index
    %c0_104 = arith.constant 0 : index
    %c0_105 = arith.constant 0 : index
    %173 = vector.load %arg3[%c7_103, %c0_104, %c0_105] : memref<10x32x1xf32, #tpu.memory_space<vmem>>, vector<1x32x1xf32>
    %174 = vector.shape_cast %173 : vector<1x32x1xf32> to vector<32x1xf32>
    %c7_106 = arith.constant 7 : index
    %c0_107 = arith.constant 0 : index
    %c0_108 = arith.constant 0 : index
    %175 = vector.load %arg4[%c7_106, %c0_107, %c0_108] : memref<10x32x1xf32, #tpu.memory_space<vmem>>, vector<1x32x1xf32>
    %176 = vector.shape_cast %175 : vector<1x32x1xf32> to vector<32x1xf32>
    %c7_109 = arith.constant 7 : index
    %c0_110 = arith.constant 0 : index
    %c0_111 = arith.constant 0 : index
    %177 = vector.load %arg5[%c7_109, %c0_110, %c0_111] : memref<10x1x1xf32, #tpu.memory_space<vmem>>, vector<1x1x1xf32>
    %178 = vector.shape_cast %177 : vector<1x1x1xf32> to vector<1x1xf32>
    %179 = vector.broadcast %172 : vector<32x1xf32> to vector<32x256xf32>
    %180 = vector.broadcast %146 : vector<1x256xf32> to vector<32x256xf32>
    %181 = arith.mulf %179, %180 : vector<32x256xf32>
    %182 = vector.broadcast %174 : vector<32x1xf32> to vector<32x256xf32>
    %183 = arith.addf %181, %182 : vector<32x256xf32>
    %184 = math.tanh %183 : vector<32x256xf32>
    %185 = vector.broadcast %176 : vector<32x1xf32> to vector<32x256xf32>
    %186 = arith.mulf %185, %184 : vector<32x256xf32>
    %cst_112 = arith.constant dense<0.000000e+00> : vector<256xf32>
    %187 = vector.multi_reduction <add>, %186, %cst_112 [0] : vector<32x256xf32> to vector<256xf32>
    %188 = vector.shape_cast %187 : vector<256xf32> to vector<1x256xf32>
    %189 = vector.broadcast %178 : vector<1x1xf32> to vector<1x256xf32>
    %190 = arith.addf %188, %189 : vector<1x256xf32>
    %191 = arith.subf %170, %146 : vector<1x256xf32>
    %192 = arith.mulf %190, %191 : vector<1x256xf32>
    %193 = arith.addf %169, %192 : vector<1x256xf32>
    %c9 = arith.constant 9 : index
    %c0_113 = arith.constant 0 : index
    %194 = vector.load %arg1[%c9, %c0_113] : memref<11x256xf32, #tpu.memory_space<vmem>>, vector<1x256xf32>
    %c8_114 = arith.constant 8 : index
    %c0_115 = arith.constant 0 : index
    %c0_116 = arith.constant 0 : index
    %195 = vector.load %arg2[%c8_114, %c0_115, %c0_116] : memref<10x32x1xf32, #tpu.memory_space<vmem>>, vector<1x32x1xf32>
    %196 = vector.shape_cast %195 : vector<1x32x1xf32> to vector<32x1xf32>
    %c8_117 = arith.constant 8 : index
    %c0_118 = arith.constant 0 : index
    %c0_119 = arith.constant 0 : index
    %197 = vector.load %arg3[%c8_117, %c0_118, %c0_119] : memref<10x32x1xf32, #tpu.memory_space<vmem>>, vector<1x32x1xf32>
    %198 = vector.shape_cast %197 : vector<1x32x1xf32> to vector<32x1xf32>
    %c8_120 = arith.constant 8 : index
    %c0_121 = arith.constant 0 : index
    %c0_122 = arith.constant 0 : index
    %199 = vector.load %arg4[%c8_120, %c0_121, %c0_122] : memref<10x32x1xf32, #tpu.memory_space<vmem>>, vector<1x32x1xf32>
    %200 = vector.shape_cast %199 : vector<1x32x1xf32> to vector<32x1xf32>
    %c8_123 = arith.constant 8 : index
    %c0_124 = arith.constant 0 : index
    %c0_125 = arith.constant 0 : index
    %201 = vector.load %arg5[%c8_123, %c0_124, %c0_125] : memref<10x1x1xf32, #tpu.memory_space<vmem>>, vector<1x1x1xf32>
    %202 = vector.shape_cast %201 : vector<1x1x1xf32> to vector<1x1xf32>
    %203 = vector.broadcast %196 : vector<32x1xf32> to vector<32x256xf32>
    %204 = vector.broadcast %170 : vector<1x256xf32> to vector<32x256xf32>
    %205 = arith.mulf %203, %204 : vector<32x256xf32>
    %206 = vector.broadcast %198 : vector<32x1xf32> to vector<32x256xf32>
    %207 = arith.addf %205, %206 : vector<32x256xf32>
    %208 = math.tanh %207 : vector<32x256xf32>
    %209 = vector.broadcast %200 : vector<32x1xf32> to vector<32x256xf32>
    %210 = arith.mulf %209, %208 : vector<32x256xf32>
    %cst_126 = arith.constant dense<0.000000e+00> : vector<256xf32>
    %211 = vector.multi_reduction <add>, %210, %cst_126 [0] : vector<32x256xf32> to vector<256xf32>
    %212 = vector.shape_cast %211 : vector<256xf32> to vector<1x256xf32>
    %213 = vector.broadcast %202 : vector<1x1xf32> to vector<1x256xf32>
    %214 = arith.addf %212, %213 : vector<1x256xf32>
    %215 = arith.subf %194, %170 : vector<1x256xf32>
    %216 = arith.mulf %214, %215 : vector<1x256xf32>
    %217 = arith.addf %193, %216 : vector<1x256xf32>
    %c10 = arith.constant 10 : index
    %c0_127 = arith.constant 0 : index
    %218 = vector.load %arg1[%c10, %c0_127] : memref<11x256xf32, #tpu.memory_space<vmem>>, vector<1x256xf32>
    %c9_128 = arith.constant 9 : index
    %c0_129 = arith.constant 0 : index
    %c0_130 = arith.constant 0 : index
    %219 = vector.load %arg2[%c9_128, %c0_129, %c0_130] : memref<10x32x1xf32, #tpu.memory_space<vmem>>, vector<1x32x1xf32>
    %220 = vector.shape_cast %219 : vector<1x32x1xf32> to vector<32x1xf32>
    %c9_131 = arith.constant 9 : index
    %c0_132 = arith.constant 0 : index
    %c0_133 = arith.constant 0 : index
    %221 = vector.load %arg3[%c9_131, %c0_132, %c0_133] : memref<10x32x1xf32, #tpu.memory_space<vmem>>, vector<1x32x1xf32>
    %222 = vector.shape_cast %221 : vector<1x32x1xf32> to vector<32x1xf32>
    %c9_134 = arith.constant 9 : index
    %c0_135 = arith.constant 0 : index
    %c0_136 = arith.constant 0 : index
    %223 = vector.load %arg4[%c9_134, %c0_135, %c0_136] : memref<10x32x1xf32, #tpu.memory_space<vmem>>, vector<1x32x1xf32>
    %224 = vector.shape_cast %223 : vector<1x32x1xf32> to vector<32x1xf32>
    %c9_137 = arith.constant 9 : index
    %c0_138 = arith.constant 0 : index
    %c0_139 = arith.constant 0 : index
    %225 = vector.load %arg5[%c9_137, %c0_138, %c0_139] : memref<10x1x1xf32, #tpu.memory_space<vmem>>, vector<1x1x1xf32>
    %226 = vector.shape_cast %225 : vector<1x1x1xf32> to vector<1x1xf32>
    %227 = vector.broadcast %220 : vector<32x1xf32> to vector<32x256xf32>
    %228 = vector.broadcast %194 : vector<1x256xf32> to vector<32x256xf32>
    %229 = arith.mulf %227, %228 : vector<32x256xf32>
    %230 = vector.broadcast %222 : vector<32x1xf32> to vector<32x256xf32>
    %231 = arith.addf %229, %230 : vector<32x256xf32>
    %232 = math.tanh %231 : vector<32x256xf32>
    %233 = vector.broadcast %224 : vector<32x1xf32> to vector<32x256xf32>
    %234 = arith.mulf %233, %232 : vector<32x256xf32>
    %cst_140 = arith.constant dense<0.000000e+00> : vector<256xf32>
    %235 = vector.multi_reduction <add>, %234, %cst_140 [0] : vector<32x256xf32> to vector<256xf32>
    %236 = vector.shape_cast %235 : vector<256xf32> to vector<1x256xf32>
    %237 = vector.broadcast %226 : vector<1x1xf32> to vector<1x256xf32>
    %238 = arith.addf %236, %237 : vector<1x256xf32>
    %239 = arith.subf %218, %194 : vector<1x256xf32>
    %240 = arith.mulf %238, %239 : vector<1x256xf32>
    %241 = arith.addf %217, %240 : vector<1x256xf32>
    %cst_141 = arith.constant 1.000000e+00 : f32
    %242 = vector.broadcast %cst_141 : f32 to vector<1x256xf32>
    %243 = arith.subf %218, %242 : vector<1x256xf32>
    %cst_142 = arith.constant 0.000000e+00 : f32
    %244 = vector.broadcast %cst_142 : f32 to vector<1x256xf32>
    %245 = arith.maximumf %243, %244 : vector<1x256xf32>
    %246 = arith.subf %245, %241 : vector<1x256xf32>
    %cst_143 = arith.constant 5.000000e-02 : f32
    %247 = vector.broadcast %cst_143 : f32 to vector<1x256xf32>
    %248 = arith.subf %246, %247 : vector<1x256xf32>
    %c0_144 = arith.constant 0 : index
    %c0_145 = arith.constant 0 : index
    %249 = vector.load %arg6[%c0_144, %c0_145] : memref<1x256xf32, #tpu.memory_space<vmem>>, vector<1x256xf32>
    tpu.vector_store %arg6[%c0_144, %c0_145], %248 {strides = array<i32>} : memref<1x256xf32, #tpu.memory_space<vmem>>, vector<1x256xf32>,
    return
  }
  func.func @transform_0(%arg0: i32) -> (i32, i32) {
    %c0_i32 = arith.constant 0 : i32
    %c0_i32_0 = arith.constant 0 : i32
    return %c0_i32, %arg0 : i32, i32
  }
  func.func @transform_1(%arg0: i32) -> (i32, i32, i32) {
    %c0_i32 = arith.constant 0 : i32
    %c0_i32_0 = arith.constant 0 : i32
    %c0_i32_1 = arith.constant 0 : i32
    %c0_i32_2 = arith.constant 0 : i32
    return %c0_i32, %c0_i32_0, %c0_i32_1 : i32, i32, i32
  }
  func.func @transform_2(%arg0: i32) -> (i32, i32, i32) {
    %c0_i32 = arith.constant 0 : i32
    %c0_i32_0 = arith.constant 0 : i32
    %c0_i32_1 = arith.constant 0 : i32
    %c0_i32_2 = arith.constant 0 : i32
    return %c0_i32, %c0_i32_0, %c0_i32_1 : i32, i32, i32
  }
  func.func @transform_3(%arg0: i32) -> (i32, i32, i32) {
    %c0_i32 = arith.constant 0 : i32
    %c0_i32_0 = arith.constant 0 : i32
    %c0_i32_1 = arith.constant 0 : i32
    %c0_i32_2 = arith.constant 0 : i32
    return %c0_i32, %c0_i32_0, %c0_i32_1 : i32, i32, i32
  }
  func.func @transform_4(%arg0: i32) -> (i32, i32, i32) {
    %c0_i32 = arith.constant 0 : i32
    %c0_i32_0 = arith.constant 0 : i32
    %c0_i32_1 = arith.constant 0 : i32
    %c0_i32_2 = arith.constant 0 : i32
    return %c0_i32, %c0_i32_0, %c0_i32_1 : i32, i32, i32
  }
  func.func @transform_5(%arg0: i32) -> (i32, i32) {
    %c0_i32 = arith.constant 0 : i32
    %c0_i32_0 = arith.constant 0 : i32
    return %c0_i32, %arg0 : i32, i32
  }
}

</mosaic_0001>

<llo_original>
// kernel: model_forward.1
$region0: #{model_forward.1}
  #allocation0 [shape = 'u32[]', space=smem, size = 0x4, offset = 0x4, fixed_abs, tag = 'smem constant byte address 0x4 - core index']
  #allocation1 [shape = 'u32[144,128]{1,0:T(1,128)}', space=vmem, size = 0x12000, scoped, tag = 'internal scratch']
  %s0 = inlined_call_operand.vmem [shape: f32[11,256], index: 0, kind: input, shape index: {}]
  %s1 = inlined_call_operand.vmem [shape: f32[10,32,1], index: 1, kind: input, shape index: {}]
  %s2 = inlined_call_operand.vmem [shape: f32[10,32,1], index: 2, kind: input, shape index: {}]
  %s3 = inlined_call_operand.vmem [shape: f32[10,32,1], index: 3, kind: input, shape index: {}]
  %s4 = inlined_call_operand.vmem [shape: f32[10,1,1], index: 4, kind: input, shape index: {}]
  %s5 = inlined_call_operand.vmem [shape: f32[1,256], index: 5, kind: output, shape index: {}]
  %s6 = sld [smem:[#allocation0]]
  $region30: #{model_forward.1} parent=0
    _
  %s8 = ssub.s32 1, %s6
  %s9 = scalar_select 0, %s8, %s6
  // Predicated region
  $region2: #{model_forward.1} parent=0 // pred_check
    _
  $region3: #{model_forward.1} parent=0 // pred_check_branch
    %11 = sbr.rel (0) target = $region5
  $region4: #{model_forward.1} parent=0 // pred_region
    _
  $region5: #{model_forward.1} parent=0 // pred_fallthru
    _
  // Predicated region
  $region6: #{model_forward.1} parent=0 // pred_check
    _
  $region7: #{model_forward.1} parent=0 // pred_check_branch
    %13 = sbr.rel (0) target = $region9
  $region8: #{model_forward.1} parent=0 // pred_region
    _
  $region9: #{model_forward.1} parent=0 // pred_fallthru
    _
  // Predicated region
  $region10: #{model_forward.1} parent=0 // pred_check
    _
  $region11: #{model_forward.1} parent=0 // pred_check_branch
    %15 = sbr.rel (0) target = $region13
  $region12: #{model_forward.1} parent=0 // pred_region
    _
  $region13: #{model_forward.1} parent=0 // pred_fallthru
    _
  // Predicated region
  $region14: #{model_forward.1} parent=0 // pred_check
    _
  $region15: #{model_forward.1} parent=0 // pred_check_branch
    %17 = sbr.rel (0) target = $region17
  $region16: #{model_forward.1} parent=0 // pred_region
    _
  $region17: #{model_forward.1} parent=0 // pred_fallthru
    _
  // Predicated region
  $region18: #{model_forward.1} parent=0 // pred_check
    _
  $region19: #{model_forward.1} parent=0 // pred_check_branch
    %19 = sbr.rel (0) target = $region21
  $region20: #{model_forward.1} parent=0 // pred_region
    _
  $region21: #{model_forward.1} parent=0 // pred_fallthru
    _
  %v20 = vld [vmem:[%s0] ss:$8 sm:$0x3]
  %s21 = scalar_lea.vmem %s0, 1
  %v22 = vld [vmem:[%s21] ss:$8 sm:$0x3]
  %v23 = vld [vmem:[%s1] sm:$0xff]
  %v24 = vld [vmem:[%s1 + $0x8] sm:$0xff]
  %v25 = vld [vmem:[%s1 + $0x10] sm:$0xff]
  %v26 = vld [vmem:[%s1 + $0x18] sm:$0xff]
  %v27 = vld [vmem:[%s2] sm:$0xff]
  %v28 = vld [vmem:[%s2 + $0x8] sm:$0xff]
  %v29 = vld [vmem:[%s2 + $0x10] sm:$0xff]
  %v30 = vld [vmem:[%s2 + $0x18] sm:$0xff]
  %v31 = vld [vmem:[%s3] sm:$0xff]
  %v32 = vld [vmem:[%s3 + $0x8] sm:$0xff]
  %v33 = vld [vmem:[%s3 + $0x10] sm:$0xff]
  %v34 = vld [vmem:[%s3 + $0x18] sm:$0xff]
  %v35 = vld [vmem:[%s4] sm:$0x1]
  %37 = vset.pattern.permute.xlu0 0
  %38 = vperm.xlu0 %37, %v23
  %v39 = vpop.permute.xlu0 %38
  %42 = vset.pattern.permute.xlu0 0
  %43 = vperm.xlu0 %42, %v24
  %v44 = vpop.permute.xlu0 %43
  %47 = vset.pattern.permute.xlu0 0
  %48 = vperm.xlu0 %47, %v25
  %v49 = vpop.permute.xlu0 %48
  %52 = vset.pattern.permute.xlu0 0
  %53 = vperm.xlu0 %52, %v26
  %v54 = vpop.permute.xlu0 %53
  %v57 = vlaneseq
  %v58 = vshrl.u32 %v57, 7
  %v59 = vsub.s32 0, %v58
  %v60 = vrot.slane %v20, %v59
  %v61 = vlaneseq
  %v62 = vshrl.u32 %v61, 7
  %v63 = vsub.s32 1, %v62
  %v64 = vrot.slane %v20, %v63
  %v67 = vmul.f32 %v39, %v60
  %v68 = vmul.f32 %v39, %v64
  %v69 = vmul.f32 %v44, %v60
  %v70 = vmul.f32 %v44, %v64
  %v71 = vmul.f32 %v49, %v60
  %v72 = vmul.f32 %v49, %v64
  %v73 = vmul.f32 %v54, %v60
  %v74 = vmul.f32 %v54, %v64
  %76 = vset.pattern.permute.xlu0 0
  %77 = vperm.xlu0 %76, %v27
  %v78 = vpop.permute.xlu0 %77
  %81 = vset.pattern.permute.xlu0 0
  %82 = vperm.xlu0 %81, %v28
  %v83 = vpop.permute.xlu0 %82
  %86 = vset.pattern.permute.xlu0 0
  %87 = vperm.xlu0 %86, %v29
  %v88 = vpop.permute.xlu0 %87
  %91 = vset.pattern.permute.xlu0 0
  %92 = vperm.xlu0 %91, %v30
  %v93 = vpop.permute.xlu0 %92
  %v95 = vadd.f32 %v67, %v78
  %v96 = vadd.f32 %v68, %v78
  %v97 = vadd.f32 %v69, %v83
  %v98 = vadd.f32 %v70, %v83
  %v99 = vadd.f32 %v71, %v88
  %v100 = vadd.f32 %v72, %v88
  %v101 = vadd.f32 %v73, %v93
  %v102 = vadd.f32 %v74, %v93
  %v103 = vtanh.pop %v95
  %v104 = vtanh.pop %v96
  %v105 = vtanh.pop %v97
  %v106 = vtanh.pop %v98
  %v107 = vtanh.pop %v99
  %v108 = vtanh.pop %v100
  %v109 = vtanh.pop %v101
  %v110 = vtanh.pop %v102
  %112 = vset.pattern.permute.xlu0 0
  %113 = vperm.xlu0 %112, %v31
  %v114 = vpop.permute.xlu0 %113
  %117 = vset.pattern.permute.xlu0 0
  %118 = vperm.xlu0 %117, %v32
  %v119 = vpop.permute.xlu0 %118
  %122 = vset.pattern.permute.xlu0 0
  %123 = vperm.xlu0 %122, %v33
  %v124 = vpop.permute.xlu0 %123
  %127 = vset.pattern.permute.xlu0 0
  %128 = vperm.xlu0 %127, %v34
  %v129 = vpop.permute.xlu0 %128
  %v131 = vmul.f32 %v114, %v103
  %v132 = vmul.f32 %v114, %v104
  %v133 = vmul.f32 %v119, %v105
  %v134 = vmul.f32 %v119, %v106
  %v135 = vmul.f32 %v124, %v107
  %v136 = vmul.f32 %v124, %v108
  %v137 = vmul.f32 %v129, %v109
  %v138 = vmul.f32 %v129, %v110
  %v139 = vadd.f32 %v131, %v133
  %v140 = vadd.f32 %v139, %v135
  %v141 = vadd.f32 %v140, %v137
  %v142 = vrot.slane %v141, 4
  %v143 = vadd.f32 %v141, %v142
  %v144 = vrot.slane %v143, 2
  %v145 = vadd.f32 %v143, %v144
  %v146 = vrot.slane %v145, 1
  %v147 = vadd.f32 %v145, %v146
  %v148 = vadd.f32 %v132, %v134
  %v149 = vadd.f32 %v148, %v136
  %v150 = vadd.f32 %v149, %v138
  %v151 = vrot.slane %v150, 4
  %v152 = vadd.f32 %v150, %v151
  %v153 = vrot.slane %v152, 2
  %v154 = vadd.f32 %v152, %v153
  %v155 = vrot.slane %v154, 1
  %v156 = vadd.f32 %v154, %v155
  %158 = vset.pattern.permute.xlu0 0
  %159 = vperm.xlu0 %158, %v35
  %v160 = vpop.permute.xlu0 %159
  %v162 = vlaneseq
  %v163 = vshrl.u32 %v162, 7
  %v164 = vsub.s32 0, %v163
  %v165 = vrot.slane %v160, %v164
  %v166 = vadd.f32 %v147, %v165
  %v167 = vadd.f32 %v156, %v165
  %v168 = vsub.f32 %v22, %v20
  %v170 = vlaneseq
  %v171 = vshrl.u32 %v170, 7
  %v172 = vsub.s32 0, %v171
  %v173 = vrot.slane %v168, %v172
  %v174 = vlaneseq
  %v175 = vshrl.u32 %v174, 7
  %v176 = vsub.s32 1, %v175
  %v177 = vrot.slane %v168, %v176
  %v180 = vmul.f32 %v166, %v173
  %v181 = vmul.f32 %v167, %v177
  %v182 = vadd.f32 %v180, 0.0
  %v183 = vadd.f32 %v181, 0.0
  %s184 = scalar_lea.vmem %s0, 2
  %v185 = vld [vmem:[%s184] ss:$8 sm:$0x3]
  %s186 = scalar_lea.vmem %s1, 32
  %v187 = vld [vmem:[%s186] sm:$0xff]
  %v188 = vld [vmem:[%s186 + $0x8] sm:$0xff]
  %v189 = vld [vmem:[%s186 + $0x10] sm:$0xff]
  %v190 = vld [vmem:[%s186 + $0x18] sm:$0xff]
  %s191 = scalar_lea.vmem %s2, 32
  %v192 = vld [vmem:[%s191] sm:$0xff]
  %v193 = vld [vmem:[%s191 + $0x8] sm:$0xff]
  %v194 = vld [vmem:[%s191 + $0x10] sm:$0xff]
  %v195 = vld [vmem:[%s191 + $0x18] sm:$0xff]
  %s196 = scalar_lea.vmem %s3, 32
  %v197 = vld [vmem:[%s196] sm:$0xff]
  %v198 = vld [vmem:[%s196 + $0x8] sm:$0xff]
  %v199 = vld [vmem:[%s196 + $0x10] sm:$0xff]
  %v200 = vld [vmem:[%s196 + $0x18] sm:$0xff]
  %s201 = scalar_lea.vmem %s4, 1
  %v202 = vld [vmem:[%s201] sm:$0x1]
  %204 = vset.pattern.permute.xlu0 0
  %205 = vperm.xlu0 %204, %v187
  %v206 = vpop.permute.xlu0 %205
  %209 = vset.pattern.permute.xlu0 0
  %210 = vperm.xlu0 %209, %v188
  %v211 = vpop.permute.xlu0 %210
  %214 = vset.pattern.permute.xlu0 0
  %215 = vperm.xlu0 %214, %v189
  %v216 = vpop.permute.xlu0 %215
  %219 = vset.pattern.permute.xlu0 0
  %220 = vperm.xlu0 %219, %v190
  %v221 = vpop.permute.xlu0 %220
  %v224 = vlaneseq
  %v225 = vshrl.u32 %v224, 7
  %v226 = vsub.s32 0, %v225
  %v227 = vrot.slane %v22, %v226
  %v228 = vlaneseq
  %v229 = vshrl.u32 %v228, 7
  %v230 = vsub.s32 1, %v229
  %v231 = vrot.slane %v22, %v230
  %v234 = vmul.f32 %v206, %v227
  %v235 = vmul.f32 %v206, %v231
  %v236 = vmul.f32 %v211, %v227
  %v237 = vmul.f32 %v211, %v231
  %v238 = vmul.f32 %v216, %v227
  %v239 = vmul.f32 %v216, %v231
  %v240 = vmul.f32 %v221, %v227
  %v241 = vmul.f32 %v221, %v231
  %243 = vset.pattern.permute.xlu0 0
  %244 = vperm.xlu0 %243, %v192
  %v245 = vpop.permute.xlu0 %244
  %248 = vset.pattern.permute.xlu0 0
  %249 = vperm.xlu0 %248, %v193
  %v250 = vpop.permute.xlu0 %249
  %253 = vset.pattern.permute.xlu0 0
  %254 = vperm.xlu0 %253, %v194
  %v255 = vpop.permute.xlu0 %254
  %258 = vset.pattern.permute.xlu0 0
  %259 = vperm.xlu0 %258, %v195
  %v260 = vpop.permute.xlu0 %259
  %v262 = vadd.f32 %v234, %v245
  %v263 = vadd.f32 %v235, %v245
  %v264 = vadd.f32 %v236, %v250
  %v265 = vadd.f32 %v237, %v250
  %v266 = vadd.f32 %v238, %v255
  %v267 = vadd.f32 %v239, %v255
  %v268 = vadd.f32 %v240, %v260
  %v269 = vadd.f32 %v241, %v260
  %v270 = vtanh.pop %v262
  %v271 = vtanh.pop %v263
  %v272 = vtanh.pop %v264
  %v273 = vtanh.pop %v265
  %v274 = vtanh.pop %v266
  %v275 = vtanh.pop %v267
  %v276 = vtanh.pop %v268
  %v277 = vtanh.pop %v269
  %279 = vset.pattern.permute.xlu0 0
  %280 = vperm.xlu0 %279, %v197
  %v281 = vpop.permute.xlu0 %280
  %284 = vset.pattern.permute.xlu0 0
  %285 = vperm.xlu0 %284, %v198
  %v286 = vpop.permute.xlu0 %285
  %289 = vset.pattern.permute.xlu0 0
  %290 = vperm.xlu0 %289, %v199
  %v291 = vpop.permute.xlu0 %290
  %294 = vset.pattern.permute.xlu0 0
  %295 = vperm.xlu0 %294, %v200
  %v296 = vpop.permute.xlu0 %295
  %v298 = vmul.f32 %v281, %v270
  %v299 = vmul.f32 %v281, %v271
  %v300 = vmul.f32 %v286, %v272
  %v301 = vmul.f32 %v286, %v273
  %v302 = vmul.f32 %v291, %v274
  %v303 = vmul.f32 %v291, %v275
  %v304 = vmul.f32 %v296, %v276
  %v305 = vmul.f32 %v296, %v277
  %v306 = vadd.f32 %v298, %v300
  %v307 = vadd.f32 %v306, %v302
  %v308 = vadd.f32 %v307, %v304
  %v309 = vrot.slane %v308, 4
  %v310 = vadd.f32 %v308, %v309
  %v311 = vrot.slane %v310, 2
  %v312 = vadd.f32 %v310, %v311
  %v313 = vrot.slane %v312, 1
  %v314 = vadd.f32 %v312, %v313
  %v315 = vadd.f32 %v299, %v301
  %v316 = vadd.f32 %v315, %v303
  %v317 = vadd.f32 %v316, %v305
  %v318 = vrot.slane %v317, 4
  %v319 = vadd.f32 %v317, %v318
  %v320 = vrot.slane %v319, 2
  %v321 = vadd.f32 %v319, %v320
  %v322 = vrot.slane %v321, 1
  %v323 = vadd.f32 %v321, %v322
  %325 = vset.pattern.permute.xlu0 0
  %326 = vperm.xlu0 %325, %v202
  %v327 = vpop.permute.xlu0 %326
  %v329 = vlaneseq
  %v330 = vshrl.u32 %v329, 7
  %v331 = vsub.s32 0, %v330
  %v332 = vrot.slane %v327, %v331
  %v333 = vadd.f32 %v314, %v332
  %v334 = vadd.f32 %v323, %v332
  %v335 = vsub.f32 %v185, %v22
  %v337 = vlaneseq
  %v338 = vshrl.u32 %v337, 7
  %v339 = vsub.s32 0, %v338
  %v340 = vrot.slane %v335, %v339
  %v341 = vlaneseq
  %v342 = vshrl.u32 %v341, 7
  %v343 = vsub.s32 1, %v342
  %v344 = vrot.slane %v335, %v343
  %v347 = vmul.f32 %v333, %v340
  %v348 = vmul.f32 %v334, %v344
  %v349 = vadd.f32 %v182, %v347
  %v350 = vadd.f32 %v183, %v348
  %s351 = scalar_lea.vmem %s0, 3
  %v352 = vld [vmem:[%s351] ss:$8 sm:$0x3]
  %s353 = scalar_lea.vmem %s1, 64
  %v354 = vld [vmem:[%s353] sm:$0xff]
  %v355 = vld [vmem:[%s353 + $0x8] sm:$0xff]
  %v356 = vld [vmem:[%s353 + $0x10] sm:$0xff]
  %v357 = vld [vmem:[%s353 + $0x18] sm:$0xff]
  %s358 = scalar_lea.vmem %s2, 64
  %v359 = vld [vmem:[%s358] sm:$0xff]
  %v360 = vld [vmem:[%s358 + $0x8] sm:$0xff]
  %v361 = vld [vmem:[%s358 + $0x10] sm:$0xff]
  %v362 = vld [vmem:[%s358 + $0x18] sm:$0xff]
  %s363 = scalar_lea.vmem %s3, 64
  %v364 = vld [vmem:[%s363] sm:$0xff]
  %v365 = vld [vmem:[%s363 + $0x8] sm:$0xff]
  %v366 = vld [vmem:[%s363 + $0x10] sm:$0xff]
  %v367 = vld [vmem:[%s363 + $0x18] sm:$0xff]
  %s368 = scalar_lea.vmem %s4, 2
  %v369 = vld [vmem:[%s368] sm:$0x1]
  %371 = vset.pattern.permute.xlu0 0
  %372 = vperm.xlu0 %371, %v354
  %v373 = vpop.permute.xlu0 %372
  %376 = vset.pattern.permute.xlu0 0
  %377 = vperm.xlu0 %376, %v355
  %v378 = vpop.permute.xlu0 %377
  %381 = vset.pattern.permute.xlu0 0
  %382 = vperm.xlu0 %381, %v356
  %v383 = vpop.permute.xlu0 %382
  %386 = vset.pattern.permute.xlu0 0
  %387 = vperm.xlu0 %386, %v357
  %v388 = vpop.permute.xlu0 %387
  %v391 = vlaneseq
  %v392 = vshrl.u32 %v391, 7
  %v393 = vsub.s32 0, %v392
  %v394 = vrot.slane %v185, %v393
  %v395 = vlaneseq
  %v396 = vshrl.u32 %v395, 7
  %v397 = vsub.s32 1, %v396
  %v398 = vrot.slane %v185, %v397
  %v401 = vmul.f32 %v373, %v394
  %v402 = vmul.f32 %v373, %v398
  %v403 = vmul.f32 %v378, %v394
  %v404 = vmul.f32 %v378, %v398
  %v405 = vmul.f32 %v383, %v394
  %v406 = vmul.f32 %v383, %v398
  %v407 = vmul.f32 %v388, %v394
  %v408 = vmul.f32 %v388, %v398
  %410 = vset.pattern.permute.xlu0 0
  %411 = vperm.xlu0 %410, %v359
  %v412 = vpop.permute.xlu0 %411
  %415 = vset.pattern.permute.xlu0 0
  %416 = vperm.xlu0 %415, %v360
  %v417 = vpop.permute.xlu0 %416
  %420 = vset.pattern.permute.xlu0 0
  %421 = vperm.xlu0 %420, %v361
  %v422 = vpop.permute.xlu0 %421
  %425 = vset.pattern.permute.xlu0 0
  %426 = vperm.xlu0 %425, %v362
  %v427 = vpop.permute.xlu0 %426
  %v429 = vadd.f32 %v401, %v412
  %v430 = vadd.f32 %v402, %v412
  %v431 = vadd.f32 %v403, %v417
  %v432 = vadd.f32 %v404, %v417
  %v433 = vadd.f32 %v405, %v422
  %v434 = vadd.f32 %v406, %v422
  %v435 = vadd.f32 %v407, %v427
  %v436 = vadd.f32 %v408, %v427
  %v437 = vtanh.pop %v429
  %v438 = vtanh.pop %v430
  %v439 = vtanh.pop %v431
  %v440 = vtanh.pop %v432
  %v441 = vtanh.pop %v433
  %v442 = vtanh.pop %v434
  %v443 = vtanh.pop %v435
  %v444 = vtanh.pop %v436
  %446 = vset.pattern.permute.xlu0 0
  %447 = vperm.xlu0 %446, %v364
  %v448 = vpop.permute.xlu0 %447
  %451 = vset.pattern.permute.xlu0 0
  %452 = vperm.xlu0 %451, %v365
  %v453 = vpop.permute.xlu0 %452
  %456 = vset.pattern.permute.xlu0 0
  %457 = vperm.xlu0 %456, %v366
  %v458 = vpop.permute.xlu0 %457
  %461 = vset.pattern.permute.xlu0 0
  %462 = vperm.xlu0 %461, %v367
  %v463 = vpop.permute.xlu0 %462
  %v465 = vmul.f32 %v448, %v437
  %v466 = vmul.f32 %v448, %v438
  %v467 = vmul.f32 %v453, %v439
  %v468 = vmul.f32 %v453, %v440
  %v469 = vmul.f32 %v458, %v441
  %v470 = vmul.f32 %v458, %v442
  %v471 = vmul.f32 %v463, %v443
  %v472 = vmul.f32 %v463, %v444
  %v473 = vadd.f32 %v465, %v467
  %v474 = vadd.f32 %v473, %v469
  %v475 = vadd.f32 %v474, %v471
  %v476 = vrot.slane %v475, 4
  %v477 = vadd.f32 %v475, %v476
  %v478 = vrot.slane %v477, 2
  %v479 = vadd.f32 %v477, %v478
  %v480 = vrot.slane %v479, 1
  %v481 = vadd.f32 %v479, %v480
  %v482 = vadd.f32 %v466, %v468
  %v483 = vadd.f32 %v482, %v470
  %v484 = vadd.f32 %v483, %v472
  %v485 = vrot.slane %v484, 4
  %v486 = vadd.f32 %v484, %v485
  %v487 = vrot.slane %v486, 2
  %v488 = vadd.f32 %v486, %v487
  %v489 = vrot.slane %v488, 1
  %v490 = vadd.f32 %v488, %v489
  %492 = vset.pattern.permute.xlu0 0
  %493 = vperm.xlu0 %492, %v369
  %v494 = vpop.permute.xlu0 %493
  %v496 = vlaneseq
  %v497 = vshrl.u32 %v496, 7
  %v498 = vsub.s32 0, %v497
  %v499 = vrot.slane %v494, %v498
  %v500 = vadd.f32 %v481, %v499
  %v501 = vadd.f32 %v490, %v499
  %v502 = vsub.f32 %v352, %v185
  %v504 = vlaneseq
  %v505 = vshrl.u32 %v504, 7
  %v506 = vsub.s32 0, %v505
  %v507 = vrot.slane %v502, %v506
  %v508 = vlaneseq
  %v509 = vshrl.u32 %v508, 7
  %v510 = vsub.s32 1, %v509
  %v511 = vrot.slane %v502, %v510
  %v514 = vmul.f32 %v500, %v507
  %v515 = vmul.f32 %v501, %v511
  %v516 = vadd.f32 %v349, %v514
  %v517 = vadd.f32 %v350, %v515
  %s518 = scalar_lea.vmem %s0, 4
  %v519 = vld [vmem:[%s518] ss:$8 sm:$0x3]
  %s520 = scalar_lea.vmem %s1, 96
  %v521 = vld [vmem:[%s520] sm:$0xff]
  %v522 = vld [vmem:[%s520 + $0x8] sm:$0xff]
  %v523 = vld [vmem:[%s520 + $0x10] sm:$0xff]
  %v524 = vld [vmem:[%s520 + $0x18] sm:$0xff]
  %s525 = scalar_lea.vmem %s2, 96
  %v526 = vld [vmem:[%s525] sm:$0xff]
  %v527 = vld [vmem:[%s525 + $0x8] sm:$0xff]
  %v528 = vld [vmem:[%s525 + $0x10] sm:$0xff]
  %v529 = vld [vmem:[%s525 + $0x18] sm:$0xff]
  %s530 = scalar_lea.vmem %s3, 96
  %v531 = vld [vmem:[%s530] sm:$0xff]
  %v532 = vld [vmem:[%s530 + $0x8] sm:$0xff]
  %v533 = vld [vmem:[%s530 + $0x10] sm:$0xff]
  %v534 = vld [vmem:[%s530 + $0x18] sm:$0xff]
  %s535 = scalar_lea.vmem %s4, 3
  %v536 = vld [vmem:[%s535] sm:$0x1]
  %538 = vset.pattern.permute.xlu0 0
  %539 = vperm.xlu0 %538, %v521
  %v540 = vpop.permute.xlu0 %539
  %543 = vset.pattern.permute.xlu0 0
  %544 = vperm.xlu0 %543, %v522
  %v545 = vpop.permute.xlu0 %544
  %548 = vset.pattern.permute.xlu0 0
  %549 = vperm.xlu0 %548, %v523
  %v550 = vpop.permute.xlu0 %549
  %553 = vset.pattern.permute.xlu0 0
  %554 = vperm.xlu0 %553, %v524
  %v555 = vpop.permute.xlu0 %554
  %v558 = vlaneseq
  %v559 = vshrl.u32 %v558, 7
  %v560 = vsub.s32 0, %v559
  %v561 = vrot.slane %v352, %v560
  %v562 = vlaneseq
  %v563 = vshrl.u32 %v562, 7
  %v564 = vsub.s32 1, %v563
  %v565 = vrot.slane %v352, %v564
  %v568 = vmul.f32 %v540, %v561
  %v569 = vmul.f32 %v540, %v565
  %v570 = vmul.f32 %v545, %v561
  %v571 = vmul.f32 %v545, %v565
  %v572 = vmul.f32 %v550, %v561
  %v573 = vmul.f32 %v550, %v565
  %v574 = vmul.f32 %v555, %v561
  %v575 = vmul.f32 %v555, %v565
  %577 = vset.pattern.permute.xlu0 0
  %578 = vperm.xlu0 %577, %v526
  %v579 = vpop.permute.xlu0 %578
  %582 = vset.pattern.permute.xlu0 0
  %583 = vperm.xlu0 %582, %v527
  %v584 = vpop.permute.xlu0 %583
  %587 = vset.pattern.permute.xlu0 0
  %588 = vperm.xlu0 %587, %v528
  %v589 = vpop.permute.xlu0 %588
  %592 = vset.pattern.permute.xlu0 0
  %593 = vperm.xlu0 %592, %v529
  %v594 = vpop.permute.xlu0 %593
  %v596 = vadd.f32 %v568, %v579
  %v597 = vadd.f32 %v569, %v579
  %v598 = vadd.f32 %v570, %v584
  %v599 = vadd.f32 %v571, %v584
  %v600 = vadd.f32 %v572, %v589
  %v601 = vadd.f32 %v573, %v589
  %v602 = vadd.f32 %v574, %v594
  %v603 = vadd.f32 %v575, %v594
  %v604 = vtanh.pop %v596
  %v605 = vtanh.pop %v597
  %v606 = vtanh.pop %v598
  %v607 = vtanh.pop %v599
  %v608 = vtanh.pop %v600
  %v609 = vtanh.pop %v601
  %v610 = vtanh.pop %v602
  %v611 = vtanh.pop %v603
  %613 = vset.pattern.permute.xlu0 0
  %614 = vperm.xlu0 %613, %v531
  %v615 = vpop.permute.xlu0 %614
  %618 = vset.pattern.permute.xlu0 0
  %619 = vperm.xlu0 %618, %v532
  %v620 = vpop.permute.xlu0 %619
  %623 = vset.pattern.permute.xlu0 0
  %624 = vperm.xlu0 %623, %v533
  %v625 = vpop.permute.xlu0 %624
  %628 = vset.pattern.permute.xlu0 0
  %629 = vperm.xlu0 %628, %v534
  %v630 = vpop.permute.xlu0 %629
  %v632 = vmul.f32 %v615, %v604
  %v633 = vmul.f32 %v615, %v605
  %v634 = vmul.f32 %v620, %v606
  %v635 = vmul.f32 %v620, %v607
  %v636 = vmul.f32 %v625, %v608
  %v637 = vmul.f32 %v625, %v609
  %v638 = vmul.f32 %v630, %v610
  %v639 = vmul.f32 %v630, %v611
  %v640 = vadd.f32 %v632, %v634
  %v641 = vadd.f32 %v640, %v636
  %v642 = vadd.f32 %v641, %v638
  %v643 = vrot.slane %v642, 4
  %v644 = vadd.f32 %v642, %v643
  %v645 = vrot.slane %v644, 2
  %v646 = vadd.f32 %v644, %v645
  %v647 = vrot.slane %v646, 1
  %v648 = vadd.f32 %v646, %v647
  %v649 = vadd.f32 %v633, %v635
  %v650 = vadd.f32 %v649, %v637
  %v651 = vadd.f32 %v650, %v639
  %v652 = vrot.slane %v651, 4
  %v653 = vadd.f32 %v651, %v652
  %v654 = vrot.slane %v653, 2
  %v655 = vadd.f32 %v653, %v654
  %v656 = vrot.slane %v655, 1
  %v657 = vadd.f32 %v655, %v656
  %659 = vset.pattern.permute.xlu0 0
  %660 = vperm.xlu0 %659, %v536
  %v661 = vpop.permute.xlu0 %660
  %v663 = vlaneseq
  %v664 = vshrl.u32 %v663, 7
  %v665 = vsub.s32 0, %v664
  %v666 = vrot.slane %v661, %v665
  %v667 = vadd.f32 %v648, %v666
  %v668 = vadd.f32 %v657, %v666
  %v669 = vsub.f32 %v519, %v352
  %v671 = vlaneseq
  %v672 = vshrl.u32 %v671, 7
  %v673 = vsub.s32 0, %v672
  %v674 = vrot.slane %v669, %v673
  %v675 = vlaneseq
  %v676 = vshrl.u32 %v675, 7
  %v677 = vsub.s32 1, %v676
  %v678 = vrot.slane %v669, %v677
  %v681 = vmul.f32 %v667, %v674
  %v682 = vmul.f32 %v668, %v678
  %v683 = vadd.f32 %v516, %v681
  %v684 = vadd.f32 %v517, %v682
  %s685 = scalar_lea.vmem %s0, 5
  %v686 = vld [vmem:[%s685] ss:$8 sm:$0x3]
  %s687 = scalar_lea.vmem %s1, 128
  %v688 = vld [vmem:[%s687] sm:$0xff]
  %v689 = vld [vmem:[%s687 + $0x8] sm:$0xff]
  %v690 = vld [vmem:[%s687 + $0x10] sm:$0xff]
  %v691 = vld [vmem:[%s687 + $0x18] sm:$0xff]
  %s692 = scalar_lea.vmem %s2, 128
  %v693 = vld [vmem:[%s692] sm:$0xff]
  %v694 = vld [vmem:[%s692 + $0x8] sm:$0xff]
  %v695 = vld [vmem:[%s692 + $0x10] sm:$0xff]
  %v696 = vld [vmem:[%s692 + $0x18] sm:$0xff]
  %s697 = scalar_lea.vmem %s3, 128
  %v698 = vld [vmem:[%s697] sm:$0xff]
  %v699 = vld [vmem:[%s697 + $0x8] sm:$0xff]
  %v700 = vld [vmem:[%s697 + $0x10] sm:$0xff]
  %v701 = vld [vmem:[%s697 + $0x18] sm:$0xff]
  %s702 = scalar_lea.vmem %s4, 4
  %v703 = vld [vmem:[%s702] sm:$0x1]
  %705 = vset.pattern.permute.xlu0 0
  %706 = vperm.xlu0 %705, %v688
  %v707 = vpop.permute.xlu0 %706
  %710 = vset.pattern.permute.xlu0 0
  %711 = vperm.xlu0 %710, %v689
  %v712 = vpop.permute.xlu0 %711
  %715 = vset.pattern.permute.xlu0 0
  %716 = vperm.xlu0 %715, %v690
  %v717 = vpop.permute.xlu0 %716
  %720 = vset.pattern.permute.xlu0 0
  %721 = vperm.xlu0 %720, %v691
  %v722 = vpop.permute.xlu0 %721
  %v725 = vlaneseq
  %v726 = vshrl.u32 %v725, 7
  %v727 = vsub.s32 0, %v726
  %v728 = vrot.slane %v519, %v727
  %v729 = vlaneseq
  %v730 = vshrl.u32 %v729, 7
  %v731 = vsub.s32 1, %v730
  %v732 = vrot.slane %v519, %v731
  %v735 = vmul.f32 %v707, %v728
  %v736 = vmul.f32 %v707, %v732
  %v737 = vmul.f32 %v712, %v728
  %v738 = vmul.f32 %v712, %v732
  %v739 = vmul.f32 %v717, %v728
  %v740 = vmul.f32 %v717, %v732
  %v741 = vmul.f32 %v722, %v728
  %v742 = vmul.f32 %v722, %v732
  %744 = vset.pattern.permute.xlu0 0
  %745 = vperm.xlu0 %744, %v693
  %v746 = vpop.permute.xlu0 %745
  %749 = vset.pattern.permute.xlu0 0
  %750 = vperm.xlu0 %749, %v694
  %v751 = vpop.permute.xlu0 %750
  %754 = vset.pattern.permute.xlu0 0
  %755 = vperm.xlu0 %754, %v695
  %v756 = vpop.permute.xlu0 %755
  %759 = vset.pattern.permute.xlu0 0
  %760 = vperm.xlu0 %759, %v696
  %v761 = vpop.permute.xlu0 %760
  %v763 = vadd.f32 %v735, %v746
  %v764 = vadd.f32 %v736, %v746
  %v765 = vadd.f32 %v737, %v751
  %v766 = vadd.f32 %v738, %v751
  %v767 = vadd.f32 %v739, %v756
  %v768 = vadd.f32 %v740, %v756
  %v769 = vadd.f32 %v741, %v761
  %v770 = vadd.f32 %v742, %v761
  %v771 = vtanh.pop %v763
  %v772 = vtanh.pop %v764
  %v773 = vtanh.pop %v765
  %v774 = vtanh.pop %v766
  %v775 = vtanh.pop %v767
  %v776 = vtanh.pop %v768
  %v777 = vtanh.pop %v769
  %v778 = vtanh.pop %v770
  %780 = vset.pattern.permute.xlu0 0
  %781 = vperm.xlu0 %780, %v698
  %v782 = vpop.permute.xlu0 %781
  %785 = vset.pattern.permute.xlu0 0
  %786 = vperm.xlu0 %785, %v699
  %v787 = vpop.permute.xlu0 %786
  %790 = vset.pattern.permute.xlu0 0
  %791 = vperm.xlu0 %790, %v700
  %v792 = vpop.permute.xlu0 %791
  %795 = vset.pattern.permute.xlu0 0
  %796 = vperm.xlu0 %795, %v701
  %v797 = vpop.permute.xlu0 %796
  %v799 = vmul.f32 %v782, %v771
  %v800 = vmul.f32 %v782, %v772
  %v801 = vmul.f32 %v787, %v773
  %v802 = vmul.f32 %v787, %v774
  %v803 = vmul.f32 %v792, %v775
  %v804 = vmul.f32 %v792, %v776
  %v805 = vmul.f32 %v797, %v777
  %v806 = vmul.f32 %v797, %v778
  %v807 = vadd.f32 %v799, %v801
  %v808 = vadd.f32 %v807, %v803
  %v809 = vadd.f32 %v808, %v805
  %v810 = vrot.slane %v809, 4
  %v811 = vadd.f32 %v809, %v810
  %v812 = vrot.slane %v811, 2
  %v813 = vadd.f32 %v811, %v812
  %v814 = vrot.slane %v813, 1
  %v815 = vadd.f32 %v813, %v814
  %v816 = vadd.f32 %v800, %v802
  %v817 = vadd.f32 %v816, %v804
  %v818 = vadd.f32 %v817, %v806
  %v819 = vrot.slane %v818, 4
  %v820 = vadd.f32 %v818, %v819
  %v821 = vrot.slane %v820, 2
  %v822 = vadd.f32 %v820, %v821
  %v823 = vrot.slane %v822, 1
  %v824 = vadd.f32 %v822, %v823
  %826 = vset.pattern.permute.xlu0 0
  %827 = vperm.xlu0 %826, %v703
  %v828 = vpop.permute.xlu0 %827
  %v830 = vlaneseq
  %v831 = vshrl.u32 %v830, 7
  %v832 = vsub.s32 0, %v831
  %v833 = vrot.slane %v828, %v832
  %v834 = vadd.f32 %v815, %v833
  %v835 = vadd.f32 %v824, %v833
  %v836 = vsub.f32 %v686, %v519
  %v838 = vlaneseq
  %v839 = vshrl.u32 %v838, 7
  %v840 = vsub.s32 0, %v839
  %v841 = vrot.slane %v836, %v840
  %v842 = vlaneseq
  %v843 = vshrl.u32 %v842, 7
  %v844 = vsub.s32 1, %v843
  %v845 = vrot.slane %v836, %v844
  %v848 = vmul.f32 %v834, %v841
  %v849 = vmul.f32 %v835, %v845
  %v850 = vadd.f32 %v683, %v848
  %v851 = vadd.f32 %v684, %v849
  %s852 = scalar_lea.vmem %s0, 6
  %v853 = vld [vmem:[%s852] ss:$8 sm:$0x3]
  %s854 = scalar_lea.vmem %s1, 160
  %v855 = vld [vmem:[%s854] sm:$0xff]
  %v856 = vld [vmem:[%s854 + $0x8] sm:$0xff]
  %v857 = vld [vmem:[%s854 + $0x10] sm:$0xff]
  %v858 = vld [vmem:[%s854 + $0x18] sm:$0xff]
  %s859 = scalar_lea.vmem %s2, 160
  %v860 = vld [vmem:[%s859] sm:$0xff]
  %v861 = vld [vmem:[%s859 + $0x8] sm:$0xff]
  %v862 = vld [vmem:[%s859 + $0x10] sm:$0xff]
  %v863 = vld [vmem:[%s859 + $0x18] sm:$0xff]
  %s864 = scalar_lea.vmem %s3, 160
  %v865 = vld [vmem:[%s864] sm:$0xff]
  %v866 = vld [vmem:[%s864 + $0x8] sm:$0xff]
  %v867 = vld [vmem:[%s864 + $0x10] sm:$0xff]
  %v868 = vld [vmem:[%s864 + $0x18] sm:$0xff]
  %s869 = scalar_lea.vmem %s4, 5
  %v870 = vld [vmem:[%s869] sm:$0x1]
  %872 = vset.pattern.permute.xlu0 0
  %873 = vperm.xlu0 %872, %v855
  %v874 = vpop.permute.xlu0 %873
  %877 = vset.pattern.permute.xlu0 0
  %878 = vperm.xlu0 %877, %v856
  %v879 = vpop.permute.xlu0 %878
  %882 = vset.pattern.permute.xlu0 0
  %883 = vperm.xlu0 %882, %v857
  %v884 = vpop.permute.xlu0 %883
  %887 = vset.pattern.permute.xlu0 0
  %888 = vperm.xlu0 %887, %v858
  %v889 = vpop.permute.xlu0 %888
  %v892 = vlaneseq
  %v893 = vshrl.u32 %v892, 7
  %v894 = vsub.s32 0, %v893
  %v895 = vrot.slane %v686, %v894
  %v896 = vlaneseq
  %v897 = vshrl.u32 %v896, 7
  %v898 = vsub.s32 1, %v897
  %v899 = vrot.slane %v686, %v898
  %v902 = vmul.f32 %v874, %v895
  %v903 = vmul.f32 %v874, %v899
  %v904 = vmul.f32 %v879, %v895
  %v905 = vmul.f32 %v879, %v899
  %v906 = vmul.f32 %v884, %v895
  %v907 = vmul.f32 %v884, %v899
  %v908 = vmul.f32 %v889, %v895
  %v909 = vmul.f32 %v889, %v899
  %911 = vset.pattern.permute.xlu0 0
  %912 = vperm.xlu0 %911, %v860
  %v913 = vpop.permute.xlu0 %912
  %916 = vset.pattern.permute.xlu0 0
  %917 = vperm.xlu0 %916, %v861
  %v918 = vpop.permute.xlu0 %917
  %921 = vset.pattern.permute.xlu0 0
  %922 = vperm.xlu0 %921, %v862
  %v923 = vpop.permute.xlu0 %922
  %926 = vset.pattern.permute.xlu0 0
  %927 = vperm.xlu0 %926, %v863
  %v928 = vpop.permute.xlu0 %927
  %v930 = vadd.f32 %v902, %v913
  %v931 = vadd.f32 %v903, %v913
  %v932 = vadd.f32 %v904, %v918
  %v933 = vadd.f32 %v905, %v918
  %v934 = vadd.f32 %v906, %v923
  %v935 = vadd.f32 %v907, %v923
  %v936 = vadd.f32 %v908, %v928
  %v937 = vadd.f32 %v909, %v928
  %v938 = vtanh.pop %v930
  %v939 = vtanh.pop %v931
  %v940 = vtanh.pop %v932
  %v941 = vtanh.pop %v933
  %v942 = vtanh.pop %v934
  %v943 = vtanh.pop %v935
  %v944 = vtanh.pop %v936
  %v945 = vtanh.pop %v937
  %947 = vset.pattern.permute.xlu0 0
  %948 = vperm.xlu0 %947, %v865
  %v949 = vpop.permute.xlu0 %948
  %952 = vset.pattern.permute.xlu0 0
  %953 = vperm.xlu0 %952, %v866
  %v954 = vpop.permute.xlu0 %953
  %957 = vset.pattern.permute.xlu0 0
  %958 = vperm.xlu0 %957, %v867
  %v959 = vpop.permute.xlu0 %958
  %962 = vset.pattern.permute.xlu0 0
  %963 = vperm.xlu0 %962, %v868
  %v964 = vpop.permute.xlu0 %963
  %v966 = vmul.f32 %v949, %v938
  %v967 = vmul.f32 %v949, %v939
  %v968 = vmul.f32 %v954, %v940
  %v969 = vmul.f32 %v954, %v941
  %v970 = vmul.f32 %v959, %v942
  %v971 = vmul.f32 %v959, %v943
  %v972 = vmul.f32 %v964, %v944
  %v973 = vmul.f32 %v964, %v945
  %v974 = vadd.f32 %v966, %v968
  %v975 = vadd.f32 %v974, %v970
  %v976 = vadd.f32 %v975, %v972
  %v977 = vrot.slane %v976, 4
  %v978 = vadd.f32 %v976, %v977
  %v979 = vrot.slane %v978, 2
  %v980 = vadd.f32 %v978, %v979
  %v981 = vrot.slane %v980, 1
  %v982 = vadd.f32 %v980, %v981
  %v983 = vadd.f32 %v967, %v969
  %v984 = vadd.f32 %v983, %v971
  %v985 = vadd.f32 %v984, %v973
  %v986 = vrot.slane %v985, 4
  %v987 = vadd.f32 %v985, %v986
  %v988 = vrot.slane %v987, 2
  %v989 = vadd.f32 %v987, %v988
  %v990 = vrot.slane %v989, 1
  %v991 = vadd.f32 %v989, %v990
  %993 = vset.pattern.permute.xlu0 0
  %994 = vperm.xlu0 %993, %v870
  %v995 = vpop.permute.xlu0 %994
  %v997 = vlaneseq
  %v998 = vshrl.u32 %v997, 7
  %v999 = vsub.s32 0, %v998
  %v1000 = vrot.slane %v995, %v999
  %v1001 = vadd.f32 %v982, %v1000
  %v1002 = vadd.f32 %v991, %v1000
  %v1003 = vsub.f32 %v853, %v686
  %v1005 = vlaneseq
  %v1006 = vshrl.u32 %v1005, 7
  %v1007 = vsub.s32 0, %v1006
  %v1008 = vrot.slane %v1003, %v1007
  %v1009 = vlaneseq
  %v1010 = vshrl.u32 %v1009, 7
  %v1011 = vsub.s32 1, %v1010
  %v1012 = vrot.slane %v1003, %v1011
  %v1015 = vmul.f32 %v1001, %v1008
  %v1016 = vmul.f32 %v1002, %v1012
  %v1017 = vadd.f32 %v850, %v1015
  %v1018 = vadd.f32 %v851, %v1016
  %s1019 = scalar_lea.vmem %s0, 7
  %v1020 = vld [vmem:[%s1019] ss:$8 sm:$0x3]
  %s1021 = scalar_lea.vmem %s1, 192
  %v1022 = vld [vmem:[%s1021] sm:$0xff]
  %v1023 = vld [vmem:[%s1021 + $0x8] sm:$0xff]
  %v1024 = vld [vmem:[%s1021 + $0x10] sm:$0xff]
  %v1025 = vld [vmem:[%s1021 + $0x18] sm:$0xff]
  %s1026 = scalar_lea.vmem %s2, 192
  %v1027 = vld [vmem:[%s1026] sm:$0xff]
  %v1028 = vld [vmem:[%s1026 + $0x8] sm:$0xff]
  %v1029 = vld [vmem:[%s1026 + $0x10] sm:$0xff]
  %v1030 = vld [vmem:[%s1026 + $0x18] sm:$0xff]
  %s1031 = scalar_lea.vmem %s3, 192
  %v1032 = vld [vmem:[%s1031] sm:$0xff]
  %v1033 = vld [vmem:[%s1031 + $0x8] sm:$0xff]
  %v1034 = vld [vmem:[%s1031 + $0x10] sm:$0xff]
  %v1035 = vld [vmem:[%s1031 + $0x18] sm:$0xff]
  %s1036 = scalar_lea.vmem %s4, 6
  %v1037 = vld [vmem:[%s1036] sm:$0x1]
  %1039 = vset.pattern.permute.xlu0 0
  %1040 = vperm.xlu0 %1039, %v1022
  %v1041 = vpop.permute.xlu0 %1040
  %1044 = vset.pattern.permute.xlu0 0
  %1045 = vperm.xlu0 %1044, %v1023
  %v1046 = vpop.permute.xlu0 %1045
  %1049 = vset.pattern.permute.xlu0 0
  %1050 = vperm.xlu0 %1049, %v1024
  %v1051 = vpop.permute.xlu0 %1050
  %1054 = vset.pattern.permute.xlu0 0
  %1055 = vperm.xlu0 %1054, %v1025
  %v1056 = vpop.permute.xlu0 %1055
  %v1059 = vlaneseq
  %v1060 = vshrl.u32 %v1059, 7
  %v1061 = vsub.s32 0, %v1060
  %v1062 = vrot.slane %v853, %v1061
  %v1063 = vlaneseq
  %v1064 = vshrl.u32 %v1063, 7
  %v1065 = vsub.s32 1, %v1064
  %v1066 = vrot.slane %v853, %v1065
  %v1069 = vmul.f32 %v1041, %v1062
  %v1070 = vmul.f32 %v1041, %v1066
  %v1071 = vmul.f32 %v1046, %v1062
  %v1072 = vmul.f32 %v1046, %v1066
  %v1073 = vmul.f32 %v1051, %v1062
  %v1074 = vmul.f32 %v1051, %v1066
  %v1075 = vmul.f32 %v1056, %v1062
  %v1076 = vmul.f32 %v1056, %v1066
  %1078 = vset.pattern.permute.xlu0 0
  %1079 = vperm.xlu0 %1078, %v1027
  %v1080 = vpop.permute.xlu0 %1079
  %1083 = vset.pattern.permute.xlu0 0
  %1084 = vperm.xlu0 %1083, %v1028
  %v1085 = vpop.permute.xlu0 %1084
  %1088 = vset.pattern.permute.xlu0 0
  %1089 = vperm.xlu0 %1088, %v1029
  %v1090 = vpop.permute.xlu0 %1089
  %1093 = vset.pattern.permute.xlu0 0
  %1094 = vperm.xlu0 %1093, %v1030
  %v1095 = vpop.permute.xlu0 %1094
  %v1097 = vadd.f32 %v1069, %v1080
  %v1098 = vadd.f32 %v1070, %v1080
  %v1099 = vadd.f32 %v1071, %v1085
  %v1100 = vadd.f32 %v1072, %v1085
  %v1101 = vadd.f32 %v1073, %v1090
  %v1102 = vadd.f32 %v1074, %v1090
  %v1103 = vadd.f32 %v1075, %v1095
  %v1104 = vadd.f32 %v1076, %v1095
  %v1105 = vtanh.pop %v1097
  %v1106 = vtanh.pop %v1098
  %v1107 = vtanh.pop %v1099
  %v1108 = vtanh.pop %v1100
  %v1109 = vtanh.pop %v1101
  %v1110 = vtanh.pop %v1102
  %v1111 = vtanh.pop %v1103
  %v1112 = vtanh.pop %v1104
  %1114 = vset.pattern.permute.xlu0 0
  %1115 = vperm.xlu0 %1114, %v1032
  %v1116 = vpop.permute.xlu0 %1115
  %1119 = vset.pattern.permute.xlu0 0
  %1120 = vperm.xlu0 %1119, %v1033
  %v1121 = vpop.permute.xlu0 %1120
  %1124 = vset.pattern.permute.xlu0 0
  %1125 = vperm.xlu0 %1124, %v1034
  %v1126 = vpop.permute.xlu0 %1125
  %1129 = vset.pattern.permute.xlu0 0
  %1130 = vperm.xlu0 %1129, %v1035
  %v1131 = vpop.permute.xlu0 %1130
  %v1133 = vmul.f32 %v1116, %v1105
  %v1134 = vmul.f32 %v1116, %v1106
  %v1135 = vmul.f32 %v1121, %v1107
  %v1136 = vmul.f32 %v1121, %v1108
  %v1137 = vmul.f32 %v1126, %v1109
  %v1138 = vmul.f32 %v1126, %v1110
  %v1139 = vmul.f32 %v1131, %v1111
  %v1140 = vmul.f32 %v1131, %v1112
  %v1141 = vadd.f32 %v1133, %v1135
  %v1142 = vadd.f32 %v1141, %v1137
  %v1143 = vadd.f32 %v1142, %v1139
  %v1144 = vrot.slane %v1143, 4
  %v1145 = vadd.f32 %v1143, %v1144
  %v1146 = vrot.slane %v1145, 2
  %v1147 = vadd.f32 %v1145, %v1146
  %v1148 = vrot.slane %v1147, 1
  %v1149 = vadd.f32 %v1147, %v1148
  %v1150 = vadd.f32 %v1134, %v1136
  %v1151 = vadd.f32 %v1150, %v1138
  %v1152 = vadd.f32 %v1151, %v1140
  %v1153 = vrot.slane %v1152, 4
  %v1154 = vadd.f32 %v1152, %v1153
  %v1155 = vrot.slane %v1154, 2
  %v1156 = vadd.f32 %v1154, %v1155
  %v1157 = vrot.slane %v1156, 1
  %v1158 = vadd.f32 %v1156, %v1157
  %1160 = vset.pattern.permute.xlu0 0
  %1161 = vperm.xlu0 %1160, %v1037
  %v1162 = vpop.permute.xlu0 %1161
  %v1164 = vlaneseq
  %v1165 = vshrl.u32 %v1164, 7
  %v1166 = vsub.s32 0, %v1165
  %v1167 = vrot.slane %v1162, %v1166
  %v1168 = vadd.f32 %v1149, %v1167
  %v1169 = vadd.f32 %v1158, %v1167
  %v1170 = vsub.f32 %v1020, %v853
  %v1172 = vlaneseq
  %v1173 = vshrl.u32 %v1172, 7
  %v1174 = vsub.s32 0, %v1173
  %v1175 = vrot.slane %v1170, %v1174
  %v1176 = vlaneseq
  %v1177 = vshrl.u32 %v1176, 7
  %v1178 = vsub.s32 1, %v1177
  %v1179 = vrot.slane %v1170, %v1178
  %v1182 = vmul.f32 %v1168, %v1175
  %v1183 = vmul.f32 %v1169, %v1179
  %v1184 = vadd.f32 %v1017, %v1182
  %v1185 = vadd.f32 %v1018, %v1183
  %s1186 = scalar_lea.vmem %s0, 16
  %v1187 = vld [vmem:[%s1186] ss:$8 sm:$0x3]
  %s1188 = scalar_lea.vmem %s1, 224
  %v1189 = vld [vmem:[%s1188] sm:$0xff]
  %v1190 = vld [vmem:[%s1188 + $0x8] sm:$0xff]
  %v1191 = vld [vmem:[%s1188 + $0x10] sm:$0xff]
  %v1192 = vld [vmem:[%s1188 + $0x18] sm:$0xff]
  %s1193 = scalar_lea.vmem %s2, 224
  %v1194 = vld [vmem:[%s1193] sm:$0xff]
  %v1195 = vld [vmem:[%s1193 + $0x8] sm:$0xff]
  %v1196 = vld [vmem:[%s1193 + $0x10] sm:$0xff]
  %v1197 = vld [vmem:[%s1193 + $0x18] sm:$0xff]
  %s1198 = scalar_lea.vmem %s3, 224
  %v1199 = vld [vmem:[%s1198] sm:$0xff]
  %v1200 = vld [vmem:[%s1198 + $0x8] sm:$0xff]
  %v1201 = vld [vmem:[%s1198 + $0x10] sm:$0xff]
  %v1202 = vld [vmem:[%s1198 + $0x18] sm:$0xff]
  %s1203 = scalar_lea.vmem %s4, 7
  %v1204 = vld [vmem:[%s1203] sm:$0x1]
  %1206 = vset.pattern.permute.xlu0 0
  %1207 = vperm.xlu0 %1206, %v1189
  %v1208 = vpop.permute.xlu0 %1207
  %1211 = vset.pattern.permute.xlu0 0
  %1212 = vperm.xlu0 %1211, %v1190
  %v1213 = vpop.permute.xlu0 %1212
  %1216 = vset.pattern.permute.xlu0 0
  %1217 = vperm.xlu0 %1216, %v1191
  %v1218 = vpop.permute.xlu0 %1217
  %1221 = vset.pattern.permute.xlu0 0
  %1222 = vperm.xlu0 %1221, %v1192
  %v1223 = vpop.permute.xlu0 %1222
  %v1226 = vlaneseq
  %v1227 = vshrl.u32 %v1226, 7
  %v1228 = vsub.s32 0, %v1227
  %v1229 = vrot.slane %v1020, %v1228
  %v1230 = vlaneseq
  %v1231 = vshrl.u32 %v1230, 7
  %v1232 = vsub.s32 1, %v1231
  %v1233 = vrot.slane %v1020, %v1232
  %v1236 = vmul.f32 %v1208, %v1229
  %v1237 = vmul.f32 %v1208, %v1233
  %v1238 = vmul.f32 %v1213, %v1229
  %v1239 = vmul.f32 %v1213, %v1233
  %v1240 = vmul.f32 %v1218, %v1229
  %v1241 = vmul.f32 %v1218, %v1233
  %v1242 = vmul.f32 %v1223, %v1229
  %v1243 = vmul.f32 %v1223, %v1233
  %1245 = vset.pattern.permute.xlu0 0
  %1246 = vperm.xlu0 %1245, %v1194
  %v1247 = vpop.permute.xlu0 %1246
  %1250 = vset.pattern.permute.xlu0 0
  %1251 = vperm.xlu0 %1250, %v1195
  %v1252 = vpop.permute.xlu0 %1251
  %1255 = vset.pattern.permute.xlu0 0
  %1256 = vperm.xlu0 %1255, %v1196
  %v1257 = vpop.permute.xlu0 %1256
  %1260 = vset.pattern.permute.xlu0 0
  %1261 = vperm.xlu0 %1260, %v1197
  %v1262 = vpop.permute.xlu0 %1261
  %v1264 = vadd.f32 %v1236, %v1247
  %v1265 = vadd.f32 %v1237, %v1247
  %v1266 = vadd.f32 %v1238, %v1252
  %v1267 = vadd.f32 %v1239, %v1252
  %v1268 = vadd.f32 %v1240, %v1257
  %v1269 = vadd.f32 %v1241, %v1257
  %v1270 = vadd.f32 %v1242, %v1262
  %v1271 = vadd.f32 %v1243, %v1262
  %v1272 = vtanh.pop %v1264
  %v1273 = vtanh.pop %v1265
  %v1274 = vtanh.pop %v1266
  %v1275 = vtanh.pop %v1267
  %v1276 = vtanh.pop %v1268
  %v1277 = vtanh.pop %v1269
  %v1278 = vtanh.pop %v1270
  %v1279 = vtanh.pop %v1271
  %1281 = vset.pattern.permute.xlu0 0
  %1282 = vperm.xlu0 %1281, %v1199
  %v1283 = vpop.permute.xlu0 %1282
  %1286 = vset.pattern.permute.xlu0 0
  %1287 = vperm.xlu0 %1286, %v1200
  %v1288 = vpop.permute.xlu0 %1287
  %1291 = vset.pattern.permute.xlu0 0
  %1292 = vperm.xlu0 %1291, %v1201
  %v1293 = vpop.permute.xlu0 %1292
  %1296 = vset.pattern.permute.xlu0 0
  %1297 = vperm.xlu0 %1296, %v1202
  %v1298 = vpop.permute.xlu0 %1297
  %v1300 = vmul.f32 %v1283, %v1272
  %v1301 = vmul.f32 %v1283, %v1273
  %v1302 = vmul.f32 %v1288, %v1274
  %v1303 = vmul.f32 %v1288, %v1275
  %v1304 = vmul.f32 %v1293, %v1276
  %v1305 = vmul.f32 %v1293, %v1277
  %v1306 = vmul.f32 %v1298, %v1278
  %v1307 = vmul.f32 %v1298, %v1279
  %v1308 = vadd.f32 %v1300, %v1302
  %v1309 = vadd.f32 %v1308, %v1304
  %v1310 = vadd.f32 %v1309, %v1306
  %v1311 = vrot.slane %v1310, 4
  %v1312 = vadd.f32 %v1310, %v1311
  %v1313 = vrot.slane %v1312, 2
  %v1314 = vadd.f32 %v1312, %v1313
  %v1315 = vrot.slane %v1314, 1
  %v1316 = vadd.f32 %v1314, %v1315
  %v1317 = vadd.f32 %v1301, %v1303
  %v1318 = vadd.f32 %v1317, %v1305
  %v1319 = vadd.f32 %v1318, %v1307
  %v1320 = vrot.slane %v1319, 4
  %v1321 = vadd.f32 %v1319, %v1320
  %v1322 = vrot.slane %v1321, 2
  %v1323 = vadd.f32 %v1321, %v1322
  %v1324 = vrot.slane %v1323, 1
  %v1325 = vadd.f32 %v1323, %v1324
  %1327 = vset.pattern.permute.xlu0 0
  %1328 = vperm.xlu0 %1327, %v1204
  %v1329 = vpop.permute.xlu0 %1328
  %v1331 = vlaneseq
  %v1332 = vshrl.u32 %v1331, 7
  %v1333 = vsub.s32 0, %v1332
  %v1334 = vrot.slane %v1329, %v1333
  %v1335 = vadd.f32 %v1316, %v1334
  %v1336 = vadd.f32 %v1325, %v1334
  %v1337 = vsub.f32 %v1187, %v1020
  %v1339 = vlaneseq
  %v1340 = vshrl.u32 %v1339, 7
  %v1341 = vsub.s32 0, %v1340
  %v1342 = vrot.slane %v1337, %v1341
  %v1343 = vlaneseq
  %v1344 = vshrl.u32 %v1343, 7
  %v1345 = vsub.s32 1, %v1344
  %v1346 = vrot.slane %v1337, %v1345
  %v1349 = vmul.f32 %v1335, %v1342
  %v1350 = vmul.f32 %v1336, %v1346
  %v1351 = vadd.f32 %v1184, %v1349
  %v1352 = vadd.f32 %v1185, %v1350
  %s1353 = scalar_lea.vmem %s0, 17
  %v1354 = vld [vmem:[%s1353] ss:$8 sm:$0x3]
  %s1355 = scalar_lea.vmem %s1, 256
  %v1356 = vld [vmem:[%s1355] sm:$0xff]
  %v1357 = vld [vmem:[%s1355 + $0x8] sm:$0xff]
  %v1358 = vld [vmem:[%s1355 + $0x10] sm:$0xff]
  %v1359 = vld [vmem:[%s1355 + $0x18] sm:$0xff]
  %s1360 = scalar_lea.vmem %s2, 256
  %v1361 = vld [vmem:[%s1360] sm:$0xff]
  %v1362 = vld [vmem:[%s1360 + $0x8] sm:$0xff]
  %v1363 = vld [vmem:[%s1360 + $0x10] sm:$0xff]
  %v1364 = vld [vmem:[%s1360 + $0x18] sm:$0xff]
  %s1365 = scalar_lea.vmem %s3, 256
  %v1366 = vld [vmem:[%s1365] sm:$0xff]
  %v1367 = vld [vmem:[%s1365 + $0x8] sm:$0xff]
  %v1368 = vld [vmem:[%s1365 + $0x10] sm:$0xff]
  %v1369 = vld [vmem:[%s1365 + $0x18] sm:$0xff]
  %s1370 = scalar_lea.vmem %s4, 8
  %v1371 = vld [vmem:[%s1370] sm:$0x1]
  %1373 = vset.pattern.permute.xlu0 0
  %1374 = vperm.xlu0 %1373, %v1356
  %v1375 = vpop.permute.xlu0 %1374
  %1378 = vset.pattern.permute.xlu0 0
  %1379 = vperm.xlu0 %1378, %v1357
  %v1380 = vpop.permute.xlu0 %1379
  %1383 = vset.pattern.permute.xlu0 0
  %1384 = vperm.xlu0 %1383, %v1358
  %v1385 = vpop.permute.xlu0 %1384
  %1388 = vset.pattern.permute.xlu0 0
  %1389 = vperm.xlu0 %1388, %v1359
  %v1390 = vpop.permute.xlu0 %1389
  %v1393 = vlaneseq
  %v1394 = vshrl.u32 %v1393, 7
  %v1395 = vsub.s32 0, %v1394
  %v1396 = vrot.slane %v1187, %v1395
  %v1397 = vlaneseq
  %v1398 = vshrl.u32 %v1397, 7
  %v1399 = vsub.s32 1, %v1398
  %v1400 = vrot.slane %v1187, %v1399
  %v1403 = vmul.f32 %v1375, %v1396
  %v1404 = vmul.f32 %v1375, %v1400
  %v1405 = vmul.f32 %v1380, %v1396
  %v1406 = vmul.f32 %v1380, %v1400
  %v1407 = vmul.f32 %v1385, %v1396
  %v1408 = vmul.f32 %v1385, %v1400
  %v1409 = vmul.f32 %v1390, %v1396
  %v1410 = vmul.f32 %v1390, %v1400
  %1412 = vset.pattern.permute.xlu0 0
  %1413 = vperm.xlu0 %1412, %v1361
  %v1414 = vpop.permute.xlu0 %1413
  %1417 = vset.pattern.permute.xlu0 0
  %1418 = vperm.xlu0 %1417, %v1362
  %v1419 = vpop.permute.xlu0 %1418
  %1422 = vset.pattern.permute.xlu0 0
  %1423 = vperm.xlu0 %1422, %v1363
  %v1424 = vpop.permute.xlu0 %1423
  %1427 = vset.pattern.permute.xlu0 0
  %1428 = vperm.xlu0 %1427, %v1364
  %v1429 = vpop.permute.xlu0 %1428
  %v1431 = vadd.f32 %v1403, %v1414
  %v1432 = vadd.f32 %v1404, %v1414
  %v1433 = vadd.f32 %v1405, %v1419
  %v1434 = vadd.f32 %v1406, %v1419
  %v1435 = vadd.f32 %v1407, %v1424
  %v1436 = vadd.f32 %v1408, %v1424
  %v1437 = vadd.f32 %v1409, %v1429
  %v1438 = vadd.f32 %v1410, %v1429
  %v1439 = vtanh.pop %v1431
  %v1440 = vtanh.pop %v1432
  %v1441 = vtanh.pop %v1433
  %v1442 = vtanh.pop %v1434
  %v1443 = vtanh.pop %v1435
  %v1444 = vtanh.pop %v1436
  %v1445 = vtanh.pop %v1437
  %v1446 = vtanh.pop %v1438
  %1448 = vset.pattern.permute.xlu0 0
  %1449 = vperm.xlu0 %1448, %v1366
  %v1450 = vpop.permute.xlu0 %1449
  %1453 = vset.pattern.permute.xlu0 0
  %1454 = vperm.xlu0 %1453, %v1367
  %v1455 = vpop.permute.xlu0 %1454
  %1458 = vset.pattern.permute.xlu0 0
  %1459 = vperm.xlu0 %1458, %v1368
  %v1460 = vpop.permute.xlu0 %1459
  %1463 = vset.pattern.permute.xlu0 0
  %1464 = vperm.xlu0 %1463, %v1369
  %v1465 = vpop.permute.xlu0 %1464
  %v1467 = vmul.f32 %v1450, %v1439
  %v1468 = vmul.f32 %v1450, %v1440
  %v1469 = vmul.f32 %v1455, %v1441
  %v1470 = vmul.f32 %v1455, %v1442
  %v1471 = vmul.f32 %v1460, %v1443
  %v1472 = vmul.f32 %v1460, %v1444
  %v1473 = vmul.f32 %v1465, %v1445
  %v1474 = vmul.f32 %v1465, %v1446
  %v1475 = vadd.f32 %v1467, %v1469
  %v1476 = vadd.f32 %v1475, %v1471
  %v1477 = vadd.f32 %v1476, %v1473
  %v1478 = vrot.slane %v1477, 4
  %v1479 = vadd.f32 %v1477, %v1478
  %v1480 = vrot.slane %v1479, 2
  %v1481 = vadd.f32 %v1479, %v1480
  %v1482 = vrot.slane %v1481, 1
  %v1483 = vadd.f32 %v1481, %v1482
  %v1484 = vadd.f32 %v1468, %v1470
  %v1485 = vadd.f32 %v1484, %v1472
  %v1486 = vadd.f32 %v1485, %v1474
  %v1487 = vrot.slane %v1486, 4
  %v1488 = vadd.f32 %v1486, %v1487
  %v1489 = vrot.slane %v1488, 2
  %v1490 = vadd.f32 %v1488, %v1489
  %v1491 = vrot.slane %v1490, 1
  %v1492 = vadd.f32 %v1490, %v1491
  %1494 = vset.pattern.permute.xlu0 0
  %1495 = vperm.xlu0 %1494, %v1371
  %v1496 = vpop.permute.xlu0 %1495
  %v1498 = vlaneseq
  %v1499 = vshrl.u32 %v1498, 7
  %v1500 = vsub.s32 0, %v1499
  %v1501 = vrot.slane %v1496, %v1500
  %v1502 = vadd.f32 %v1483, %v1501
  %v1503 = vadd.f32 %v1492, %v1501
  %v1504 = vsub.f32 %v1354, %v1187
  %v1506 = vlaneseq
  %v1507 = vshrl.u32 %v1506, 7
  %v1508 = vsub.s32 0, %v1507
  %v1509 = vrot.slane %v1504, %v1508
  %v1510 = vlaneseq
  %v1511 = vshrl.u32 %v1510, 7
  %v1512 = vsub.s32 1, %v1511
  %v1513 = vrot.slane %v1504, %v1512
  %v1516 = vmul.f32 %v1502, %v1509
  %v1517 = vmul.f32 %v1503, %v1513
  %v1518 = vadd.f32 %v1351, %v1516
  %v1519 = vadd.f32 %v1352, %v1517
  %s1520 = scalar_lea.vmem %s0, 18
  %v1521 = vld [vmem:[%s1520] ss:$8 sm:$0x3]
  %s1522 = scalar_lea.vmem %s1, 288
  %v1523 = vld [vmem:[%s1522] sm:$0xff]
  %v1524 = vld [vmem:[%s1522 + $0x8] sm:$0xff]
  %v1525 = vld [vmem:[%s1522 + $0x10] sm:$0xff]
  %v1526 = vld [vmem:[%s1522 + $0x18] sm:$0xff]
  %s1527 = scalar_lea.vmem %s2, 288
  %v1528 = vld [vmem:[%s1527] sm:$0xff]
  %v1529 = vld [vmem:[%s1527 + $0x8] sm:$0xff]
  %v1530 = vld [vmem:[%s1527 + $0x10] sm:$0xff]
  %v1531 = vld [vmem:[%s1527 + $0x18] sm:$0xff]
  %s1532 = scalar_lea.vmem %s3, 288
  %v1533 = vld [vmem:[%s1532] sm:$0xff]
  %v1534 = vld [vmem:[%s1532 + $0x8] sm:$0xff]
  %v1535 = vld [vmem:[%s1532 + $0x10] sm:$0xff]
  %v1536 = vld [vmem:[%s1532 + $0x18] sm:$0xff]
  %s1537 = scalar_lea.vmem %s4, 9
  %v1538 = vld [vmem:[%s1537] sm:$0x1]
  %1540 = vset.pattern.permute.xlu0 0
  %1541 = vperm.xlu0 %1540, %v1523
  %v1542 = vpop.permute.xlu0 %1541
  %1545 = vset.pattern.permute.xlu0 0
  %1546 = vperm.xlu0 %1545, %v1524
  %v1547 = vpop.permute.xlu0 %1546
  %1550 = vset.pattern.permute.xlu0 0
  %1551 = vperm.xlu0 %1550, %v1525
  %v1552 = vpop.permute.xlu0 %1551
  %1555 = vset.pattern.permute.xlu0 0
  %1556 = vperm.xlu0 %1555, %v1526
  %v1557 = vpop.permute.xlu0 %1556
  %v1560 = vlaneseq
  %v1561 = vshrl.u32 %v1560, 7
  %v1562 = vsub.s32 0, %v1561
  %v1563 = vrot.slane %v1354, %v1562
  %v1564 = vlaneseq
  %v1565 = vshrl.u32 %v1564, 7
  %v1566 = vsub.s32 1, %v1565
  %v1567 = vrot.slane %v1354, %v1566
  %v1570 = vmul.f32 %v1542, %v1563
  %v1571 = vmul.f32 %v1542, %v1567
  %v1572 = vmul.f32 %v1547, %v1563
  %v1573 = vmul.f32 %v1547, %v1567
  %v1574 = vmul.f32 %v1552, %v1563
  %v1575 = vmul.f32 %v1552, %v1567
  %v1576 = vmul.f32 %v1557, %v1563
  %v1577 = vmul.f32 %v1557, %v1567
  %1579 = vset.pattern.permute.xlu0 0
  %1580 = vperm.xlu0 %1579, %v1528
  %v1581 = vpop.permute.xlu0 %1580
  %1584 = vset.pattern.permute.xlu0 0
  %1585 = vperm.xlu0 %1584, %v1529
  %v1586 = vpop.permute.xlu0 %1585
  %1589 = vset.pattern.permute.xlu0 0
  %1590 = vperm.xlu0 %1589, %v1530
  %v1591 = vpop.permute.xlu0 %1590
  %1594 = vset.pattern.permute.xlu0 0
  %1595 = vperm.xlu0 %1594, %v1531
  %v1596 = vpop.permute.xlu0 %1595
  %v1598 = vadd.f32 %v1570, %v1581
  %v1599 = vadd.f32 %v1571, %v1581
  %v1600 = vadd.f32 %v1572, %v1586
  %v1601 = vadd.f32 %v1573, %v1586
  %v1602 = vadd.f32 %v1574, %v1591
  %v1603 = vadd.f32 %v1575, %v1591
  %v1604 = vadd.f32 %v1576, %v1596
  %v1605 = vadd.f32 %v1577, %v1596
  %v1606 = vtanh.pop %v1598
  %v1607 = vtanh.pop %v1599
  %v1608 = vtanh.pop %v1600
  %v1609 = vtanh.pop %v1601
  %v1610 = vtanh.pop %v1602
  %v1611 = vtanh.pop %v1603
  %v1612 = vtanh.pop %v1604
  %v1613 = vtanh.pop %v1605
  %1615 = vset.pattern.permute.xlu0 0
  %1616 = vperm.xlu0 %1615, %v1533
  %v1617 = vpop.permute.xlu0 %1616
  %1620 = vset.pattern.permute.xlu0 0
  %1621 = vperm.xlu0 %1620, %v1534
  %v1622 = vpop.permute.xlu0 %1621
  %1625 = vset.pattern.permute.xlu0 0
  %1626 = vperm.xlu0 %1625, %v1535
  %v1627 = vpop.permute.xlu0 %1626
  %1630 = vset.pattern.permute.xlu0 0
  %1631 = vperm.xlu0 %1630, %v1536
  %v1632 = vpop.permute.xlu0 %1631
  %v1634 = vmul.f32 %v1617, %v1606
  %v1635 = vmul.f32 %v1617, %v1607
  %v1636 = vmul.f32 %v1622, %v1608
  %v1637 = vmul.f32 %v1622, %v1609
  %v1638 = vmul.f32 %v1627, %v1610
  %v1639 = vmul.f32 %v1627, %v1611
  %v1640 = vmul.f32 %v1632, %v1612
  %v1641 = vmul.f32 %v1632, %v1613
  %v1642 = vadd.f32 %v1634, %v1636
  %v1643 = vadd.f32 %v1642, %v1638
  %v1644 = vadd.f32 %v1643, %v1640
  %v1645 = vrot.slane %v1644, 4
  %v1646 = vadd.f32 %v1644, %v1645
  %v1647 = vrot.slane %v1646, 2
  %v1648 = vadd.f32 %v1646, %v1647
  %v1649 = vrot.slane %v1648, 1
  %v1650 = vadd.f32 %v1648, %v1649
  %v1651 = vadd.f32 %v1635, %v1637
  %v1652 = vadd.f32 %v1651, %v1639
  %v1653 = vadd.f32 %v1652, %v1641
  %v1654 = vrot.slane %v1653, 4
  %v1655 = vadd.f32 %v1653, %v1654
  %v1656 = vrot.slane %v1655, 2
  %v1657 = vadd.f32 %v1655, %v1656
  %v1658 = vrot.slane %v1657, 1
  %v1659 = vadd.f32 %v1657, %v1658
  %1661 = vset.pattern.permute.xlu0 0
  %1662 = vperm.xlu0 %1661, %v1538
  %v1663 = vpop.permute.xlu0 %1662
  %v1665 = vlaneseq
  %v1666 = vshrl.u32 %v1665, 7
  %v1667 = vsub.s32 0, %v1666
  %v1668 = vrot.slane %v1663, %v1667
  %v1669 = vadd.f32 %v1650, %v1668
  %v1670 = vadd.f32 %v1659, %v1668
  %v1671 = vsub.f32 %v1521, %v1354
  %v1673 = vlaneseq
  %v1674 = vshrl.u32 %v1673, 7
  %v1675 = vsub.s32 0, %v1674
  %v1676 = vrot.slane %v1671, %v1675
  %v1677 = vlaneseq
  %v1678 = vshrl.u32 %v1677, 7
  %v1679 = vsub.s32 1, %v1678
  %v1680 = vrot.slane %v1671, %v1679
  %v1683 = vmul.f32 %v1669, %v1676
  %v1684 = vmul.f32 %v1670, %v1680
  %v1685 = vadd.f32 %v1518, %v1683
  %v1686 = vadd.f32 %v1519, %v1684
  %v1687 = vsub.f32 %v1521, 1.0
  %v1688 = vmax.f32 %v1687, 0.0
  %v1691 = vcombine.low %v1685, %v1686
  %v1693 = vunpack.c.l.s4 1966171168
  %v1694 = vunpack.c.0.s8 %v1693
  %v1695 = vlaneseq
  %v1696 = vshrl.u32 %v1695, 7
  %v1697 = vsub.s32 %v1694, %v1696
  %v1698 = vrot.slane %v1691, %v1697
  %v1700 = vunpack.c.l.s4 1966171168
  %v1701 = vunpack.c.0.s8 %v1700
  %v1702 = vlaneseq
  %v1703 = vshrl.u32 %v1702, 7
  %v1704 = vsub.s32 %v1701, %v1703
  %v1705 = vrot.slane %v1698, %v1704
  %v1707 = vsub.f32 %v1688, %v1705
  %v1708 = vsub.f32 %v1707, 0.05
  %v1709 = vlaneseq
  %vm1710 = vcmp.ge.s32.totalorder %v1709, 0
  %vm1711 = vcmp.lt.s32.totalorder %v1709, 256
  %vm1712 = vmand %vm1710, %vm1711
  %1713 = vst.msk [vmem:[%s5] sm:$0x3] %vm1712, %v1708
  // Predicated region
  $region22: #{model_forward.1} parent=0 // pred_check
    _
  $region23: #{model_forward.1} parent=0 // pred_check_branch
    %1715 = sbr.rel (0) target = $region25
  $region24: #{model_forward.1} parent=0 // pred_region
    _
  $region25: #{model_forward.1} parent=0 // pred_fallthru
    _
  // Predicated region
  $region26: #{model_forward.1} parent=0 // pred_check
    _
  $region27: #{model_forward.1} parent=0 // pred_check_branch
    %1717 = sbr.rel (0) target = $region29
  $region28: #{model_forward.1} parent=0 // pred_region
    _
  $region29: #{model_forward.1} parent=0 // pred_fallthru
    _

</llo_original>
